<compile_context>
chip_gen: v7x
topology: tpu7x:2x2x1
jax: 0.10.0
libtpu: 0.0.40
codegen_flags: <defaults>
</compile_context>

<pallas_src>
import functools

import jax
import jax.numpy as jnp
from jax.experimental import pallas as pl
from jax.experimental.pallas import tpu as pltpu


def _layer_norm(x, gamma, beta, eps):
    mu = jnp.mean(x, axis=-1, keepdims=True)
    var = jnp.mean((x - mu) * (x - mu), axis=-1, keepdims=True)
    return (x - mu) * jax.lax.rsqrt(var + eps) * gamma + beta


def _predictor_kernel(
    enc_ref, trg_ref, mask_ref,
    wq_ref, wk_ref, wv_ref, wo_ref,
    w1_ref, b1_ref, w2_ref, b2_ref,
    ga_ref, ba_ref, gf_ref, bf_ref, go_ref, bo_ref,
    out_ref,
    *, n_head, d_k, d_v,
):
    bt, lq, d_model = trg_ref.shape
    _, lk, _ = enc_ref.shape

    trg = trg_ref[...]                                   # [Bt, Lq, D] f32 (residual)
    trg_flat = trg.reshape(bt * lq, d_model)             # leading-dim merge (free)
    trg_bf = trg_flat.astype(jnp.bfloat16)
    enc_flat = enc_ref[...].reshape(bt * lk, d_model)    # [Bt*Lk, D] bf16

    mask = mask_ref[...].astype(jnp.float32)             # [Bt, Lq, Lk]
    scale = 1.0 / (float(d_k) ** 0.5)

    # --- Multi-head cross attention (q = trg_time_query, k = v = enc_output) ---
    head_ctx = []
    for h in range(n_head):                              # head = leading ref index (free)
        qh = jnp.dot(trg_bf, wq_ref[h],
                     preferred_element_type=jnp.float32) * scale   # [Bt*Lq, dk]
        kh = jnp.dot(enc_flat, wk_ref[h],
                     preferred_element_type=jnp.float32)            # [Bt*Lk, dk]
        vh = jnp.dot(enc_flat, wv_ref[h],
                     preferred_element_type=jnp.float32)            # [Bt*Lk, dv]

        qh = qh.reshape(bt, lq, d_k).astype(jnp.bfloat16)
        kh = kh.reshape(bt, lk, d_k).astype(jnp.bfloat16)
        vh = vh.reshape(bt, lk, d_v).astype(jnp.bfloat16)

        s = jnp.einsum("bqd,bkd->bqk", qh, kh,
                       preferred_element_type=jnp.float32)           # [Bt, Lq, Lk]
        s = jnp.where(mask > 0.0, s, -1e9)

        m = jnp.max(s, axis=-1, keepdims=True)
        p = jnp.exp(s - m)
        p = p * pl.reciprocal(jnp.sum(p, axis=-1, keepdims=True), approx=True)

        ctx = jnp.einsum("bqk,bkd->bqd", p.astype(jnp.bfloat16), vh,
                         preferred_element_type=jnp.float32)          # [Bt, Lq, dv]
        head_ctx.append(ctx.reshape(bt * lq, d_v))

    ctx_all = jnp.concatenate(head_ctx, axis=-1).astype(jnp.bfloat16)  # [Bt*Lq, H*dv]
    attn = jnp.dot(ctx_all, wo_ref[...],
                   preferred_element_type=jnp.float32)                 # [Bt*Lq, D]

    x = attn + trg_flat                                   # residual = query input
    x = _layer_norm(x, ga_ref[0], ba_ref[0], 1e-6)

    # --- Position-wise feed-forward ---
    h1 = jnp.dot(x.astype(jnp.bfloat16), w1_ref[...],
                 preferred_element_type=jnp.float32) + b1_ref[0]
    h1 = jnp.maximum(h1, 0.0)
    y = jnp.dot(h1.astype(jnp.bfloat16), w2_ref[...],
                preferred_element_type=jnp.float32) + b2_ref[0]
    y = y + x
    y = _layer_norm(y, gf_ref[0], bf_ref[0], 1e-6)

    # --- Predictor's final LayerNorm ---
    out = _layer_norm(y, go_ref[0], bo_ref[0], 1e-6)
    out_ref[...] = out.reshape(bt, lq, d_model)


def _pick_batch_block(batch, lq, target_rows=256):
    """Largest divisor of `batch` such that bt*lq covers the MXU M axis."""
    bt = min(batch, max(1, (target_rows + lq - 1) // lq))
    while batch % bt:
        bt -= 1
    return bt


def predictor_forward(enc_output, subseq_io_mask, trg_time_query, src_time,
                      len_seq, params, *, n_head, d_k, d_v):
    del src_time  # TODO(synk): unused in the assumed PredictorLayer
    B, Lk, D = enc_output.shape
    _, Lq, _ = trg_time_query.shape
    d_inner = params["w1"].shape[1]

    bt = _pick_batch_block(B, Lq)
    grid = (B // bt,)

    # Narrow / cast HBM inputs: bf16 activations for matmuls, int8 mask,
    # f32 query (needed for the residual path inside the kernel).
    enc_bf = enc_output.astype(jnp.bfloat16)
    trg_f32 = trg_time_query.astype(jnp.float32)
    mask_i8 = (subseq_io_mask > 0).astype(jnp.int8)

    weights = (
        params["wq"].astype(jnp.bfloat16),   # [H, D, dk]
        params["wk"].astype(jnp.bfloat16),   # [H, D, dk]
        params["wv"].astype(jnp.bfloat16),   # [H, D, dv]
        params["wo"].astype(jnp.bfloat16),   # [H*dv, D]
        params["w1"].astype(jnp.bfloat16),   # [D, d_inner]
        params["b1"],                        # [1, d_inner] f32
        params["w2"].astype(jnp.bfloat16),   # [d_inner, D]
        params["b2"],                        # [1, D] f32
        params["ga"], params["ba"],          # LN (attention)
        params["gf"], params["bf"],          # LN (FFN)
        params["go"], params["bo"],          # LN (final Predictor norm)
    )

    kernel = functools.partial(_predictor_kernel, n_head=n_head, d_k=d_k, d_v=d_v)

    def full_spec(arr):
        return pl.BlockSpec(arr.shape, lambda b, n=arr.ndim: (0,) * n)

    batched = lambda shape: pl.BlockSpec(shape, lambda b: (b, 0, 0))

    flops = 2 * B * (
        Lq * D * n_head * d_k            # Q projection
        + Lk * D * n_head * d_k          # K projection
        + Lk * D * n_head * d_v          # V projection
        + n_head * Lq * Lk * (d_k + d_v) # scores + PV
        + Lq * n_head * d_v * D          # output projection
        + 2 * Lq * D * d_inner           # FFN
    )
    transcendentals = B * n_head * Lq * Lk + 3 * B * Lq
    bytes_accessed = int(
        enc_bf.size * 2 + trg_f32.size * 4 + mask_i8.size
        + sum(int(w.size) * w.dtype.itemsize for w in weights)
        + B * Lq * D * 4
    )

    out = pl.pallas_call(
        kernel,
        out_shape=jax.ShapeDtypeStruct((B, Lq, D), jnp.float32),
        grid_spec=pltpu.PrefetchScalarGridSpec(
            num_scalar_prefetch=0,
            grid=grid,
            in_specs=[
                batched((bt, Lk, D)),        # enc_output (bf16)
                batched((bt, Lq, D)),        # trg_time_query (f32)
                batched((bt, Lq, Lk)),       # subseq_io_mask (int8)
            ] + [full_spec(w) for w in weights],
            out_specs=batched((bt, Lq, D)),
        ),
        compiler_params=pltpu.CompilerParams(
            dimension_semantics=("parallel",)),
        cost_estimate=pl.CostEstimate(
            flops=int(flops),
            transcendentals=int(transcendentals),
            bytes_accessed=bytes_accessed),
    )(enc_bf, trg_f32, mask_i8, *weights)

    max_seq_len = int(max(len_seq))
    return out[:, :max_seq_len, :]


def init_params(key, d_model, d_inner, n_head, d_k, d_v):
    ks = jax.random.split(key, 6)
    s = 0.02
    return {
        # head-leading projection weights: head index is a free ref index
        "wq": s * jax.random.normal(ks[0], (n_head, d_model, d_k), jnp.float32),
        "wk": s * jax.random.normal(ks[1], (n_head, d_model, d_k), jnp.float32),
        "wv": s * jax.random.normal(ks[2], (n_head, d_model, d_v), jnp.float32),
        "wo": s * jax.random.normal(ks[3], (n_head * d_v, d_model), jnp.float32),
        "w1": s * jax.random.normal(ks[4], (d_model, d_inner), jnp.float32),
        "b1": jnp.zeros((1, d_inner), jnp.float32),
        "w2": s * jax.random.normal(ks[5], (d_inner, d_model), jnp.float32),
        "b2": jnp.zeros((1, d_model), jnp.float32),
        # LayerNorm affine params (attention LN, FFN LN, final Predictor LN)
        "ga": jnp.ones((1, d_model), jnp.float32),
        "ba": jnp.zeros((1, d_model), jnp.float32),
        "gf": jnp.ones((1, d_model), jnp.float32),
        "bf": jnp.zeros((1, d_model), jnp.float32),
        "go": jnp.ones((1, d_model), jnp.float32),
        "bo": jnp.zeros((1, d_model), jnp.float32),
    }


if __name__ == "__main__":
    B, Lq, Lk = 2, 8, 8
    d_model, d_inner = 32, 64
    n_head, d_k, d_v = 2, 16, 16

    key = jax.random.PRNGKey(0)
    k_enc, k_trg, k_time, k_par = jax.random.split(key, 4)

    enc_output = jax.random.normal(k_enc, (B, Lk, d_model), jnp.float32)
    trg_time_query = jax.random.normal(k_trg, (B, Lq, d_model), jnp.float32)
    src_time = jax.random.normal(k_time, (B, Lk), jnp.float32)
    # lower-triangular subsequence io mask, broadcast over batch
    subseq_io_mask = (jnp.arange(Lk)[None, :] <= jnp.arange(Lq)[:, None]).astype(
        jnp.float32)[None].repeat(B, axis=0)
    len_seq = [5, 6]

    params = init_params(k_par, d_model, d_inner, n_head, d_k, d_v)

    out = predictor_forward(enc_output, subseq_io_mask, trg_time_query, src_time,
                            len_seq, params, n_head=n_head, d_k=d_k, d_v=d_v)
    out = jax.block_until_ready(out)
    assert out.shape == (B, max(len_seq), d_model), out.shape
    assert bool(jnp.all(jnp.isfinite(out)))
    print("KERNEL_OK")
</pallas_src>

<mosaic_0001>
module attributes {stable_mosaic.version = 11 : i64} {
  func.func @_predictor_kernel(%arg0: i32, %arg1: memref<2x8x32xbf16, #tpu.memory_space<vmem>>, %arg2: memref<2x8x32xf32, #tpu.memory_space<vmem>>, %arg3: memref<2x8x8xi8, #tpu.memory_space<vmem>>, %arg4: memref<2x32x16xbf16, #tpu.memory_space<vmem>>, %arg5: memref<2x32x16xbf16, #tpu.memory_space<vmem>>, %arg6: memref<2x32x16xbf16, #tpu.memory_space<vmem>>, %arg7: memref<32x32xbf16, #tpu.memory_space<vmem>>, %arg8: memref<32x64xbf16, #tpu.memory_space<vmem>>, %arg9: memref<1x64xf32, #tpu.memory_space<vmem>>, %arg10: memref<64x32xbf16, #tpu.memory_space<vmem>>, %arg11: memref<1x32xf32, #tpu.memory_space<vmem>>, %arg12: memref<1x32xf32, #tpu.memory_space<vmem>>, %arg13: memref<1x32xf32, #tpu.memory_space<vmem>>, %arg14: memref<1x32xf32, #tpu.memory_space<vmem>>, %arg15: memref<1x32xf32, #tpu.memory_space<vmem>>, %arg16: memref<1x32xf32, #tpu.memory_space<vmem>>, %arg17: memref<1x32xf32, #tpu.memory_space<vmem>>, %arg18: memref<2x8x32xf32, #tpu.memory_space<vmem>>) attributes {dimension_semantics = [#tpu.dimension_semantics<parallel>], iteration_bounds = array<i64: 1>, scalar_prefetch = 0 : i64, scratch_operands = 0 : i64, tpu.core_type = #tpu.core_type<tc>, window_params = [{transform_indices = @transform_0, window_bounds = array<i64: 2, 8, 32>}, {transform_indices = @transform_1, window_bounds = array<i64: 2, 8, 32>}, {transform_indices = @transform_2, window_bounds = array<i64: 2, 8, 8>}, {pipeline_mode = #tpu.pipeline_mode<synchronous>, transform_indices = @transform_3, window_bounds = array<i64: 2, 32, 16>}, {pipeline_mode = #tpu.pipeline_mode<synchronous>, transform_indices = @transform_4, window_bounds = array<i64: 2, 32, 16>}, {pipeline_mode = #tpu.pipeline_mode<synchronous>, transform_indices = @transform_5, window_bounds = array<i64: 2, 32, 16>}, {pipeline_mode = #tpu.pipeline_mode<synchronous>, transform_indices = @transform_6, window_bounds = array<i64: 32, 32>}, {pipeline_mode = #tpu.pipeline_mode<synchronous>, transform_indices = @transform_7, window_bounds = array<i64: 32, 64>}, {pipeline_mode = #tpu.pipeline_mode<synchronous>, transform_indices = @transform_8, window_bounds = array<i64: 1, 64>}, {pipeline_mode = #tpu.pipeline_mode<synchronous>, transform_indices = @transform_9, window_bounds = array<i64: 64, 32>}, {pipeline_mode = #tpu.pipeline_mode<synchronous>, transform_indices = @transform_10, window_bounds = array<i64: 1, 32>}, {pipeline_mode = #tpu.pipeline_mode<synchronous>, transform_indices = @transform_11, window_bounds = array<i64: 1, 32>}, {pipeline_mode = #tpu.pipeline_mode<synchronous>, transform_indices = @transform_12, window_bounds = array<i64: 1, 32>}, {pipeline_mode = #tpu.pipeline_mode<synchronous>, transform_indices = @transform_13, window_bounds = array<i64: 1, 32>}, {pipeline_mode = #tpu.pipeline_mode<synchronous>, transform_indices = @transform_14, window_bounds = array<i64: 1, 32>}, {pipeline_mode = #tpu.pipeline_mode<synchronous>, transform_indices = @transform_15, window_bounds = array<i64: 1, 32>}, {pipeline_mode = #tpu.pipeline_mode<synchronous>, transform_indices = @transform_16, window_bounds = array<i64: 1, 32>}, {transform_indices = @transform_17, window_bounds = array<i64: 2, 8, 32>}]} {
    %c0 = arith.constant 0 : index
    %c0_0 = arith.constant 0 : index
    %c0_1 = arith.constant 0 : index
    %0 = vector.load %arg2[%c0, %c0_0, %c0_1] : memref<2x8x32xf32, #tpu.memory_space<vmem>>, vector<2x8x32xf32>
    %1 = vector.shape_cast %0 : vector<2x8x32xf32> to vector<16x32xf32>
    %2 = arith.truncf %1 : vector<16x32xf32> to vector<16x32xbf16>
    %c0_2 = arith.constant 0 : index
    %c0_3 = arith.constant 0 : index
    %c0_4 = arith.constant 0 : index
    %3 = vector.load %arg1[%c0_2, %c0_3, %c0_4] : memref<2x8x32xbf16, #tpu.memory_space<vmem>>, vector<2x8x32xbf16>
    %4 = vector.shape_cast %3 : vector<2x8x32xbf16> to vector<16x32xbf16>
    %c0_5 = arith.constant 0 : index
    %c0_6 = arith.constant 0 : index
    %c0_7 = arith.constant 0 : index
    %5 = vector.load %arg3[%c0_5, %c0_6, %c0_7] : memref<2x8x8xi8, #tpu.memory_space<vmem>>, vector<2x8x8xi8>
    %6 = arith.sitofp %5 : vector<2x8x8xi8> to vector<2x8x8xf32>
    %c0_8 = arith.constant 0 : index
    %c0_9 = arith.constant 0 : index
    %c0_10 = arith.constant 0 : index
    %7 = vector.load %arg4[%c0_8, %c0_9, %c0_10] : memref<2x32x16xbf16, #tpu.memory_space<vmem>>, vector<1x32x16xbf16>
    %8 = vector.shape_cast %7 : vector<1x32x16xbf16> to vector<32x16xbf16>
    %cst = arith.constant dense<0.000000e+00> : vector<16x16xf32>
    %9 = tpu.matmul %2, %8, %cst {dimension_numbers = #tpu.dot_dimension_numbers<[1], [0], [0], [1], [0, 0, 1, 1], [], []>} : vector<16x32xbf16>, vector<32x16xbf16>, vector<16x16xf32> -> vector<16x16xf32>
    %cst_11 = arith.constant 2.500000e-01 : f32
    %10 = vector.broadcast %cst_11 : f32 to vector<16x16xf32>
    %11 = arith.mulf %9, %10 : vector<16x16xf32>
    %c0_12 = arith.constant 0 : index
    %c0_13 = arith.constant 0 : index
    %c0_14 = arith.constant 0 : index
    %12 = vector.load %arg5[%c0_12, %c0_13, %c0_14] : memref<2x32x16xbf16, #tpu.memory_space<vmem>>, vector<1x32x16xbf16>
    %13 = vector.shape_cast %12 : vector<1x32x16xbf16> to vector<32x16xbf16>
    %cst_15 = arith.constant dense<0.000000e+00> : vector<16x16xf32>
    %14 = tpu.matmul %4, %13, %cst_15 {dimension_numbers = #tpu.dot_dimension_numbers<[1], [0], [0], [1], [0, 0, 1, 1], [], []>} : vector<16x32xbf16>, vector<32x16xbf16>, vector<16x16xf32> -> vector<16x16xf32>
    %c0_16 = arith.constant 0 : index
    %c0_17 = arith.constant 0 : index
    %c0_18 = arith.constant 0 : index
    %15 = vector.load %arg6[%c0_16, %c0_17, %c0_18] : memref<2x32x16xbf16, #tpu.memory_space<vmem>>, vector<1x32x16xbf16>
    %16 = vector.shape_cast %15 : vector<1x32x16xbf16> to vector<32x16xbf16>
    %cst_19 = arith.constant dense<0.000000e+00> : vector<16x16xf32>
    %17 = tpu.matmul %4, %16, %cst_19 {dimension_numbers = #tpu.dot_dimension_numbers<[1], [0], [0], [1], [0, 0, 1, 1], [], []>} : vector<16x32xbf16>, vector<32x16xbf16>, vector<16x16xf32> -> vector<16x16xf32>
    %18 = vector.shape_cast %11 : vector<16x16xf32> to vector<2x8x16xf32>
    %19 = arith.truncf %18 : vector<2x8x16xf32> to vector<2x8x16xbf16>
    %20 = vector.shape_cast %14 : vector<16x16xf32> to vector<2x8x16xf32>
    %21 = arith.truncf %20 : vector<2x8x16xf32> to vector<2x8x16xbf16>
    %22 = vector.shape_cast %17 : vector<16x16xf32> to vector<2x8x16xf32>
    %23 = arith.truncf %22 : vector<2x8x16xf32> to vector<2x8x16xbf16>
    "tpu.trace_start"() <{level = 10 : i32, message = "bqd,bkd->bqk"}> : () -> ()
    %cst_20 = arith.constant dense<0.000000e+00> : vector<2x8x8xf32>
    %24 = tpu.matmul %19, %21, %cst_20 {dimension_numbers = #tpu.dot_dimension_numbers<[2], [2], [1], [1], [0, 0, 0, 1, 1, 1], [0], [0]>} : vector<2x8x16xbf16>, vector<2x8x16xbf16>, vector<2x8x8xf32> -> vector<2x8x8xf32>
    %cst_21 = arith.constant 0.000000e+00 : f32
    "tpu.trace_stop"() : () -> ()
    %25 = vector.broadcast %cst_21 : f32 to vector<2x8x8xf32>
    %26 = arith.cmpf ogt, %6, %25 : vector<2x8x8xf32>
    %cst_22 = arith.constant -1.000000e+09 : f32
    %27 = vector.broadcast %cst_22 : f32 to vector<2x8x8xf32>
    %28 = arith.select %26, %24, %27 : vector<2x8x8xi1>, vector<2x8x8xf32>
    %cst_23 = arith.constant dense<0xFF800000> : vector<2x8xf32>
    %29 = vector.multi_reduction <maximumf>, %28, %cst_23 [2] : vector<2x8x8xf32> to vector<2x8xf32>
    %30 = vector.shape_cast %29 : vector<2x8xf32> to vector<2x8x1xf32>
    %31 = vector.broadcast %30 : vector<2x8x1xf32> to vector<2x8x8xf32>
    %32 = arith.subf %28, %31 : vector<2x8x8xf32>
    %33 = math.exp %32 : vector<2x8x8xf32>
    %cst_24 = arith.constant dense<0.000000e+00> : vector<2x8xf32>
    %34 = vector.multi_reduction <add>, %33, %cst_24 [2] : vector<2x8x8xf32> to vector<2x8xf32>
    %35 = vector.shape_cast %34 : vector<2x8xf32> to vector<2x8x1xf32>
    %36 = tpu.reciprocal %35 {approx = true} : vector<2x8x1xf32> -> vector<2x8x1xf32>
    %37 = vector.broadcast %36 : vector<2x8x1xf32> to vector<2x8x8xf32>
    %38 = arith.mulf %33, %37 : vector<2x8x8xf32>
    %39 = arith.truncf %38 : vector<2x8x8xf32> to vector<2x8x8xbf16>
    "tpu.trace_start"() <{level = 10 : i32, message = "bqk,bkd->bqd"}> : () -> ()
    %cst_25 = arith.constant dense<0.000000e+00> : vector<2x8x16xf32>
    %40 = tpu.matmul %39, %23, %cst_25 {dimension_numbers = #tpu.dot_dimension_numbers<[2], [1], [1], [2], [0, 0, 0, 1, 1, 2], [0], [0]>} : vector<2x8x8xbf16>, vector<2x8x16xbf16>, vector<2x8x16xf32> -> vector<2x8x16xf32>
    "tpu.trace_stop"() : () -> ()
    %41 = vector.shape_cast %40 : vector<2x8x16xf32> to vector<16x16xf32>
    %c1 = arith.constant 1 : index
    %c0_26 = arith.constant 0 : index
    %c0_27 = arith.constant 0 : index
    %42 = vector.load %arg4[%c1, %c0_26, %c0_27] : memref<2x32x16xbf16, #tpu.memory_space<vmem>>, vector<1x32x16xbf16>
    %43 = vector.shape_cast %42 : vector<1x32x16xbf16> to vector<32x16xbf16>
    %cst_28 = arith.constant dense<0.000000e+00> : vector<16x16xf32>
    %44 = tpu.matmul %2, %43, %cst_28 {dimension_numbers = #tpu.dot_dimension_numbers<[1], [0], [0], [1], [0, 0, 1, 1], [], []>} : vector<16x32xbf16>, vector<32x16xbf16>, vector<16x16xf32> -> vector<16x16xf32>
    %cst_29 = arith.constant 2.500000e-01 : f32
    %45 = vector.broadcast %cst_29 : f32 to vector<16x16xf32>
    %46 = arith.mulf %44, %45 : vector<16x16xf32>
    %c1_30 = arith.constant 1 : index
    %c0_31 = arith.constant 0 : index
    %c0_32 = arith.constant 0 : index
    %47 = vector.load %arg5[%c1_30, %c0_31, %c0_32] : memref<2x32x16xbf16, #tpu.memory_space<vmem>>, vector<1x32x16xbf16>
    %48 = vector.shape_cast %47 : vector<1x32x16xbf16> to vector<32x16xbf16>
    %cst_33 = arith.constant dense<0.000000e+00> : vector<16x16xf32>
    %49 = tpu.matmul %4, %48, %cst_33 {dimension_numbers = #tpu.dot_dimension_numbers<[1], [0], [0], [1], [0, 0, 1, 1], [], []>} : vector<16x32xbf16>, vector<32x16xbf16>, vector<16x16xf32> -> vector<16x16xf32>
    %c1_34 = arith.constant 1 : index
    %c0_35 = arith.constant 0 : index
    %c0_36 = arith.constant 0 : index
    %50 = vector.load %arg6[%c1_34, %c0_35, %c0_36] : memref<2x32x16xbf16, #tpu.memory_space<vmem>>, vector<1x32x16xbf16>
    %51 = vector.shape_cast %50 : vector<1x32x16xbf16> to vector<32x16xbf16>
    %cst_37 = arith.constant dense<0.000000e+00> : vector<16x16xf32>
    %52 = tpu.matmul %4, %51, %cst_37 {dimension_numbers = #tpu.dot_dimension_numbers<[1], [0], [0], [1], [0, 0, 1, 1], [], []>} : vector<16x32xbf16>, vector<32x16xbf16>, vector<16x16xf32> -> vector<16x16xf32>
    %53 = vector.shape_cast %46 : vector<16x16xf32> to vector<2x8x16xf32>
    %54 = arith.truncf %53 : vector<2x8x16xf32> to vector<2x8x16xbf16>
    %55 = vector.shape_cast %49 : vector<16x16xf32> to vector<2x8x16xf32>
    %56 = arith.truncf %55 : vector<2x8x16xf32> to vector<2x8x16xbf16>
    %57 = vector.shape_cast %52 : vector<16x16xf32> to vector<2x8x16xf32>
    %58 = arith.truncf %57 : vector<2x8x16xf32> to vector<2x8x16xbf16>
    "tpu.trace_start"() <{level = 10 : i32, message = "bqd,bkd->bqk"}> : () -> ()
    %cst_38 = arith.constant dense<0.000000e+00> : vector<2x8x8xf32>
    %59 = tpu.matmul %54, %56, %cst_38 {dimension_numbers = #tpu.dot_dimension_numbers<[2], [2], [1], [1], [0, 0, 0, 1, 1, 1], [0], [0]>} : vector<2x8x16xbf16>, vector<2x8x16xbf16>, vector<2x8x8xf32> -> vector<2x8x8xf32>
    %cst_39 = arith.constant 0.000000e+00 : f32
    "tpu.trace_stop"() : () -> ()
    %60 = vector.broadcast %cst_39 : f32 to vector<2x8x8xf32>
    %61 = arith.cmpf ogt, %6, %60 : vector<2x8x8xf32>
    %cst_40 = arith.constant -1.000000e+09 : f32
    %62 = vector.broadcast %cst_40 : f32 to vector<2x8x8xf32>
    %63 = arith.select %61, %59, %62 : vector<2x8x8xi1>, vector<2x8x8xf32>
    %cst_41 = arith.constant dense<0xFF800000> : vector<2x8xf32>
    %64 = vector.multi_reduction <maximumf>, %63, %cst_41 [2] : vector<2x8x8xf32> to vector<2x8xf32>
    %65 = vector.shape_cast %64 : vector<2x8xf32> to vector<2x8x1xf32>
    %66 = vector.broadcast %65 : vector<2x8x1xf32> to vector<2x8x8xf32>
    %67 = arith.subf %63, %66 : vector<2x8x8xf32>
    %68 = math.exp %67 : vector<2x8x8xf32>
    %cst_42 = arith.constant dense<0.000000e+00> : vector<2x8xf32>
    %69 = vector.multi_reduction <add>, %68, %cst_42 [2] : vector<2x8x8xf32> to vector<2x8xf32>
    %70 = vector.shape_cast %69 : vector<2x8xf32> to vector<2x8x1xf32>
    %71 = tpu.reciprocal %70 {approx = true} : vector<2x8x1xf32> -> vector<2x8x1xf32>
    %72 = vector.broadcast %71 : vector<2x8x1xf32> to vector<2x8x8xf32>
    %73 = arith.mulf %68, %72 : vector<2x8x8xf32>
    %74 = arith.truncf %73 : vector<2x8x8xf32> to vector<2x8x8xbf16>
    "tpu.trace_start"() <{level = 10 : i32, message = "bqk,bkd->bqd"}> : () -> ()
    %cst_43 = arith.constant dense<0.000000e+00> : vector<2x8x16xf32>
    %75 = tpu.matmul %74, %58, %cst_43 {dimension_numbers = #tpu.dot_dimension_numbers<[2], [1], [1], [2], [0, 0, 0, 1, 1, 2], [0], [0]>} : vector<2x8x8xbf16>, vector<2x8x16xbf16>, vector<2x8x16xf32> -> vector<2x8x16xf32>
    "tpu.trace_stop"() : () -> ()
    %76 = vector.shape_cast %75 : vector<2x8x16xf32> to vector<16x16xf32>
    %77 = tpu.concatenate %41, %76 in 1 : vector<16x16xf32>, vector<16x16xf32> -> vector<16x32xf32>
    %78 = arith.truncf %77 : vector<16x32xf32> to vector<16x32xbf16>
    %c0_44 = arith.constant 0 : index
    %c0_45 = arith.constant 0 : index
    %79 = vector.load %arg7[%c0_44, %c0_45] : memref<32x32xbf16, #tpu.memory_space<vmem>>, vector<32x32xbf16>
    %cst_46 = arith.constant dense<0.000000e+00> : vector<16x32xf32>
    %80 = tpu.matmul %78, %79, %cst_46 {dimension_numbers = #tpu.dot_dimension_numbers<[1], [0], [0], [1], [0, 0, 1, 1], [], []>} : vector<16x32xbf16>, vector<32x32xbf16>, vector<16x32xf32> -> vector<16x32xf32>
    %81 = arith.addf %80, %1 : vector<16x32xf32>
    %c0_47 = arith.constant 0 : index
    %c0_48 = arith.constant 0 : index
    %82 = vector.load %arg12[%c0_47, %c0_48] : memref<1x32xf32, #tpu.memory_space<vmem>>, vector<1x32xf32>
    %83 = vector.shape_cast %82 : vector<1x32xf32> to vector<32xf32>
    %c0_49 = arith.constant 0 : index
    %c0_50 = arith.constant 0 : index
    %84 = vector.load %arg13[%c0_49, %c0_50] : memref<1x32xf32, #tpu.memory_space<vmem>>, vector<1x32xf32>
    %85 = vector.shape_cast %84 : vector<1x32xf32> to vector<32xf32>
    %cst_51 = arith.constant dense<0.000000e+00> : vector<16xf32>
    %86 = vector.multi_reduction <add>, %81, %cst_51 [1] : vector<16x32xf32> to vector<16xf32>
    %87 = vector.shape_cast %86 : vector<16xf32> to vector<16x1xf32>
    %cst_52 = arith.constant 3.200000e+01 : f32
    %88 = vector.broadcast %cst_52 : f32 to vector<16x1xf32>
    %89 = arith.divf %87, %88 : vector<16x1xf32>
    %90 = vector.broadcast %89 : vector<16x1xf32> to vector<16x32xf32>
    %91 = arith.subf %81, %90 : vector<16x32xf32>
    %92 = vector.broadcast %89 : vector<16x1xf32> to vector<16x32xf32>
    %93 = arith.subf %81, %92 : vector<16x32xf32>
    %94 = arith.mulf %91, %93 : vector<16x32xf32>
    %cst_53 = arith.constant dense<0.000000e+00> : vector<16xf32>
    %95 = vector.multi_reduction <add>, %94, %cst_53 [1] : vector<16x32xf32> to vector<16xf32>
    %96 = vector.shape_cast %95 : vector<16xf32> to vector<16x1xf32>
    %cst_54 = arith.constant 3.200000e+01 : f32
    %97 = vector.broadcast %cst_54 : f32 to vector<16x1xf32>
    %98 = arith.divf %96, %97 : vector<16x1xf32>
    %99 = vector.broadcast %89 : vector<16x1xf32> to vector<16x32xf32>
    %100 = arith.subf %81, %99 : vector<16x32xf32>
    %cst_55 = arith.constant 9.99999997E-7 : f32
    %101 = vector.broadcast %cst_55 : f32 to vector<16x1xf32>
    %102 = arith.addf %98, %101 : vector<16x1xf32>
    %103 = math.rsqrt %102 : vector<16x1xf32>
    %104 = vector.broadcast %103 : vector<16x1xf32> to vector<16x32xf32>
    %105 = arith.mulf %100, %104 : vector<16x32xf32>
    %106 = vector.shape_cast %83 : vector<32xf32> to vector<1x32xf32>
    %107 = vector.broadcast %106 : vector<1x32xf32> to vector<16x32xf32>
    %108 = arith.mulf %105, %107 : vector<16x32xf32>
    %109 = vector.shape_cast %85 : vector<32xf32> to vector<1x32xf32>
    %110 = vector.broadcast %109 : vector<1x32xf32> to vector<16x32xf32>
    %111 = arith.addf %108, %110 : vector<16x32xf32>
    %112 = arith.truncf %111 : vector<16x32xf32> to vector<16x32xbf16>
    %c0_56 = arith.constant 0 : index
    %c0_57 = arith.constant 0 : index
    %113 = vector.load %arg8[%c0_56, %c0_57] : memref<32x64xbf16, #tpu.memory_space<vmem>>, vector<32x64xbf16>
    %cst_58 = arith.constant dense<0.000000e+00> : vector<16x64xf32>
    %114 = tpu.matmul %112, %113, %cst_58 {dimension_numbers = #tpu.dot_dimension_numbers<[1], [0], [0], [1], [0, 0, 1, 1], [], []>} : vector<16x32xbf16>, vector<32x64xbf16>, vector<16x64xf32> -> vector<16x64xf32>
    %c0_59 = arith.constant 0 : index
    %c0_60 = arith.constant 0 : index
    %115 = vector.load %arg9[%c0_59, %c0_60] : memref<1x64xf32, #tpu.memory_space<vmem>>, vector<1x64xf32>
    %116 = vector.shape_cast %115 : vector<1x64xf32> to vector<64xf32>
    %117 = vector.shape_cast %116 : vector<64xf32> to vector<1x64xf32>
    %118 = vector.broadcast %117 : vector<1x64xf32> to vector<16x64xf32>
    %119 = arith.addf %114, %118 : vector<16x64xf32>
    %cst_61 = arith.constant 0.000000e+00 : f32
    %120 = vector.broadcast %cst_61 : f32 to vector<16x64xf32>
    %121 = arith.maximumf %119, %120 : vector<16x64xf32>
    %122 = arith.truncf %121 : vector<16x64xf32> to vector<16x64xbf16>
    %c0_62 = arith.constant 0 : index
    %c0_63 = arith.constant 0 : index
    %123 = vector.load %arg10[%c0_62, %c0_63] : memref<64x32xbf16, #tpu.memory_space<vmem>>, vector<64x32xbf16>
    %cst_64 = arith.constant dense<0.000000e+00> : vector<16x32xf32>
    %124 = tpu.matmul %122, %123, %cst_64 {dimension_numbers = #tpu.dot_dimension_numbers<[1], [0], [0], [1], [0, 0, 1, 1], [], []>} : vector<16x64xbf16>, vector<64x32xbf16>, vector<16x32xf32> -> vector<16x32xf32>
    %c0_65 = arith.constant 0 : index
    %c0_66 = arith.constant 0 : index
    %125 = vector.load %arg11[%c0_65, %c0_66] : memref<1x32xf32, #tpu.memory_space<vmem>>, vector<1x32xf32>
    %126 = vector.shape_cast %125 : vector<1x32xf32> to vector<32xf32>
    %127 = vector.shape_cast %126 : vector<32xf32> to vector<1x32xf32>
    %128 = vector.broadcast %127 : vector<1x32xf32> to vector<16x32xf32>
    %129 = arith.addf %124, %128 : vector<16x32xf32>
    %130 = arith.addf %129, %111 : vector<16x32xf32>
    %c0_67 = arith.constant 0 : index
    %c0_68 = arith.constant 0 : index
    %131 = vector.load %arg14[%c0_67, %c0_68] : memref<1x32xf32, #tpu.memory_space<vmem>>, vector<1x32xf32>
    %132 = vector.shape_cast %131 : vector<1x32xf32> to vector<32xf32>
    %c0_69 = arith.constant 0 : index
    %c0_70 = arith.constant 0 : index
    %133 = vector.load %arg15[%c0_69, %c0_70] : memref<1x32xf32, #tpu.memory_space<vmem>>, vector<1x32xf32>
    %134 = vector.shape_cast %133 : vector<1x32xf32> to vector<32xf32>
    %cst_71 = arith.constant dense<0.000000e+00> : vector<16xf32>
    %135 = vector.multi_reduction <add>, %130, %cst_71 [1] : vector<16x32xf32> to vector<16xf32>
    %136 = vector.shape_cast %135 : vector<16xf32> to vector<16x1xf32>
    %cst_72 = arith.constant 3.200000e+01 : f32
    %137 = vector.broadcast %cst_72 : f32 to vector<16x1xf32>
    %138 = arith.divf %136, %137 : vector<16x1xf32>
    %139 = vector.broadcast %138 : vector<16x1xf32> to vector<16x32xf32>
    %140 = arith.subf %130, %139 : vector<16x32xf32>
    %141 = vector.broadcast %138 : vector<16x1xf32> to vector<16x32xf32>
    %142 = arith.subf %130, %141 : vector<16x32xf32>
    %143 = arith.mulf %140, %142 : vector<16x32xf32>
    %cst_73 = arith.constant dense<0.000000e+00> : vector<16xf32>
    %144 = vector.multi_reduction <add>, %143, %cst_73 [1] : vector<16x32xf32> to vector<16xf32>
    %145 = vector.shape_cast %144 : vector<16xf32> to vector<16x1xf32>
    %cst_74 = arith.constant 3.200000e+01 : f32
    %146 = vector.broadcast %cst_74 : f32 to vector<16x1xf32>
    %147 = arith.divf %145, %146 : vector<16x1xf32>
    %148 = vector.broadcast %138 : vector<16x1xf32> to vector<16x32xf32>
    %149 = arith.subf %130, %148 : vector<16x32xf32>
    %cst_75 = arith.constant 9.99999997E-7 : f32
    %150 = vector.broadcast %cst_75 : f32 to vector<16x1xf32>
    %151 = arith.addf %147, %150 : vector<16x1xf32>
    %152 = math.rsqrt %151 : vector<16x1xf32>
    %153 = vector.broadcast %152 : vector<16x1xf32> to vector<16x32xf32>
    %154 = arith.mulf %149, %153 : vector<16x32xf32>
    %155 = vector.shape_cast %132 : vector<32xf32> to vector<1x32xf32>
    %156 = vector.broadcast %155 : vector<1x32xf32> to vector<16x32xf32>
    %157 = arith.mulf %154, %156 : vector<16x32xf32>
    %158 = vector.shape_cast %134 : vector<32xf32> to vector<1x32xf32>
    %159 = vector.broadcast %158 : vector<1x32xf32> to vector<16x32xf32>
    %160 = arith.addf %157, %159 : vector<16x32xf32>
    %c0_76 = arith.constant 0 : index
    %c0_77 = arith.constant 0 : index
    %161 = vector.load %arg16[%c0_76, %c0_77] : memref<1x32xf32, #tpu.memory_space<vmem>>, vector<1x32xf32>
    %162 = vector.shape_cast %161 : vector<1x32xf32> to vector<32xf32>
    %c0_78 = arith.constant 0 : index
    %c0_79 = arith.constant 0 : index
    %163 = vector.load %arg17[%c0_78, %c0_79] : memref<1x32xf32, #tpu.memory_space<vmem>>, vector<1x32xf32>
    %164 = vector.shape_cast %163 : vector<1x32xf32> to vector<32xf32>
    %cst_80 = arith.constant dense<0.000000e+00> : vector<16xf32>
    %165 = vector.multi_reduction <add>, %160, %cst_80 [1] : vector<16x32xf32> to vector<16xf32>
    %166 = vector.shape_cast %165 : vector<16xf32> to vector<16x1xf32>
    %cst_81 = arith.constant 3.200000e+01 : f32
    %167 = vector.broadcast %cst_81 : f32 to vector<16x1xf32>
    %168 = arith.divf %166, %167 : vector<16x1xf32>
    %169 = vector.broadcast %168 : vector<16x1xf32> to vector<16x32xf32>
    %170 = arith.subf %160, %169 : vector<16x32xf32>
    %171 = vector.broadcast %168 : vector<16x1xf32> to vector<16x32xf32>
    %172 = arith.subf %160, %171 : vector<16x32xf32>
    %173 = arith.mulf %170, %172 : vector<16x32xf32>
    %cst_82 = arith.constant dense<0.000000e+00> : vector<16xf32>
    %174 = vector.multi_reduction <add>, %173, %cst_82 [1] : vector<16x32xf32> to vector<16xf32>
    %175 = vector.shape_cast %174 : vector<16xf32> to vector<16x1xf32>
    %cst_83 = arith.constant 3.200000e+01 : f32
    %176 = vector.broadcast %cst_83 : f32 to vector<16x1xf32>
    %177 = arith.divf %175, %176 : vector<16x1xf32>
    %178 = vector.broadcast %168 : vector<16x1xf32> to vector<16x32xf32>
    %179 = arith.subf %160, %178 : vector<16x32xf32>
    %cst_84 = arith.constant 9.99999997E-7 : f32
    %180 = vector.broadcast %cst_84 : f32 to vector<16x1xf32>
    %181 = arith.addf %177, %180 : vector<16x1xf32>
    %182 = math.rsqrt %181 : vector<16x1xf32>
    %183 = vector.broadcast %182 : vector<16x1xf32> to vector<16x32xf32>
    %184 = arith.mulf %179, %183 : vector<16x32xf32>
    %185 = vector.shape_cast %162 : vector<32xf32> to vector<1x32xf32>
    %186 = vector.broadcast %185 : vector<1x32xf32> to vector<16x32xf32>
    %187 = arith.mulf %184, %186 : vector<16x32xf32>
    %188 = vector.shape_cast %164 : vector<32xf32> to vector<1x32xf32>
    %189 = vector.broadcast %188 : vector<1x32xf32> to vector<16x32xf32>
    %190 = arith.addf %187, %189 : vector<16x32xf32>
    %191 = vector.shape_cast %190 : vector<16x32xf32> to vector<2x8x32xf32>
    %c0_85 = arith.constant 0 : index
    %c0_86 = arith.constant 0 : index
    %c0_87 = arith.constant 0 : index
    %192 = vector.load %arg18[%c0_85, %c0_86, %c0_87] : memref<2x8x32xf32, #tpu.memory_space<vmem>>, vector<2x8x32xf32>
    tpu.vector_store %arg18[%c0_85, %c0_86, %c0_87], %191 {strides = array<i32>} : memref<2x8x32xf32, #tpu.memory_space<vmem>>, vector<2x8x32xf32>,
    return
  }
  func.func @transform_0(%arg0: i32) -> (i32, i32, i32) {
    %c0_i32 = arith.constant 0 : i32
    %c0_i32_0 = arith.constant 0 : i32
    %c0_i32_1 = arith.constant 0 : i32
    return %arg0, %c0_i32, %c0_i32_0 : i32, i32, i32
  }
  func.func @transform_1(%arg0: i32) -> (i32, i32, i32) {
    %c0_i32 = arith.constant 0 : i32
    %c0_i32_0 = arith.constant 0 : i32
    %c0_i32_1 = arith.constant 0 : i32
    return %arg0, %c0_i32, %c0_i32_0 : i32, i32, i32
  }
  func.func @transform_2(%arg0: i32) -> (i32, i32, i32) {
    %c0_i32 = arith.constant 0 : i32
    %c0_i32_0 = arith.constant 0 : i32
    %c0_i32_1 = arith.constant 0 : i32
    return %arg0, %c0_i32, %c0_i32_0 : i32, i32, i32
  }
  func.func @transform_3(%arg0: i32) -> (i32, i32, i32) {
    %c0_i32 = arith.constant 0 : i32
    %c0_i32_0 = arith.constant 0 : i32
    %c0_i32_1 = arith.constant 0 : i32
    %c0_i32_2 = arith.constant 0 : i32
    return %c0_i32, %c0_i32_0, %c0_i32_1 : i32, i32, i32
  }
  func.func @transform_4(%arg0: i32) -> (i32, i32, i32) {
    %c0_i32 = arith.constant 0 : i32
    %c0_i32_0 = arith.constant 0 : i32
    %c0_i32_1 = arith.constant 0 : i32
    %c0_i32_2 = arith.constant 0 : i32
    return %c0_i32, %c0_i32_0, %c0_i32_1 : i32, i32, i32
  }
  func.func @transform_5(%arg0: i32) -> (i32, i32, i32) {
    %c0_i32 = arith.constant 0 : i32
    %c0_i32_0 = arith.constant 0 : i32
    %c0_i32_1 = arith.constant 0 : i32
    %c0_i32_2 = arith.constant 0 : i32
    return %c0_i32, %c0_i32_0, %c0_i32_1 : i32, i32, i32
  }
  func.func @transform_6(%arg0: i32) -> (i32, i32) {
    %c0_i32 = arith.constant 0 : i32
    %c0_i32_0 = arith.constant 0 : i32
    %c0_i32_1 = arith.constant 0 : i32
    return %c0_i32, %c0_i32_0 : i32, i32
  }
  func.func @transform_7(%arg0: i32) -> (i32, i32) {
    %c0_i32 = arith.constant 0 : i32
    %c0_i32_0 = arith.constant 0 : i32
    %c0_i32_1 = arith.constant 0 : i32
    return %c0_i32, %c0_i32_0 : i32, i32
  }
  func.func @transform_8(%arg0: i32) -> (i32, i32) {
    %c0_i32 = arith.constant 0 : i32
    %c0_i32_0 = arith.constant 0 : i32
    %c0_i32_1 = arith.constant 0 : i32
    return %c0_i32, %c0_i32_0 : i32, i32
  }
  func.func @transform_9(%arg0: i32) -> (i32, i32) {
    %c0_i32 = arith.constant 0 : i32
    %c0_i32_0 = arith.constant 0 : i32
    %c0_i32_1 = arith.constant 0 : i32
    return %c0_i32, %c0_i32_0 : i32, i32
  }
  func.func @transform_10(%arg0: i32) -> (i32, i32) {
    %c0_i32 = arith.constant 0 : i32
    %c0_i32_0 = arith.constant 0 : i32
    %c0_i32_1 = arith.constant 0 : i32
    return %c0_i32, %c0_i32_0 : i32, i32
  }
  func.func @transform_11(%arg0: i32) -> (i32, i32) {
    %c0_i32 = arith.constant 0 : i32
    %c0_i32_0 = arith.constant 0 : i32
    %c0_i32_1 = arith.constant 0 : i32
    return %c0_i32, %c0_i32_0 : i32, i32
  }
  func.func @transform_12(%arg0: i32) -> (i32, i32) {
    %c0_i32 = arith.constant 0 : i32
    %c0_i32_0 = arith.constant 0 : i32
    %c0_i32_1 = arith.constant 0 : i32
    return %c0_i32, %c0_i32_0 : i32, i32
  }
  func.func @transform_13(%arg0: i32) -> (i32, i32) {
    %c0_i32 = arith.constant 0 : i32
    %c0_i32_0 = arith.constant 0 : i32
    %c0_i32_1 = arith.constant 0 : i32
    return %c0_i32, %c0_i32_0 : i32, i32
  }
  func.func @transform_14(%arg0: i32) -> (i32, i32) {
    %c0_i32 = arith.constant 0 : i32
    %c0_i32_0 = arith.constant 0 : i32
    %c0_i32_1 = arith.constant 0 : i32
    return %c0_i32, %c0_i32_0 : i32, i32
  }
  func.func @transform_15(%arg0: i32) -> (i32, i32) {
    %c0_i32 = arith.constant 0 : i32
    %c0_i32_0 = arith.constant 0 : i32
    %c0_i32_1 = arith.constant 0 : i32
    return %c0_i32, %c0_i32_0 : i32, i32
  }
  func.func @transform_16(%arg0: i32) -> (i32, i32) {
    %c0_i32 = arith.constant 0 : i32
    %c0_i32_0 = arith.constant 0 : i32
    %c0_i32_1 = arith.constant 0 : i32
    return %c0_i32, %c0_i32_0 : i32, i32
  }
  func.func @transform_17(%arg0: i32) -> (i32, i32, i32) {
    %c0_i32 = arith.constant 0 : i32
    %c0_i32_0 = arith.constant 0 : i32
    %c0_i32_1 = arith.constant 0 : i32
    return %arg0, %c0_i32, %c0_i32_0 : i32, i32, i32
  }
}

</mosaic_0001>

<llo_original>
// kernel: tpu_custom_call.1
$region0: #{tpu_custom_call.1}
  #allocation0 [shape = 'u32[]', space=smem, size = 0x4, offset = 0x4, fixed_abs, tag = 'smem constant byte address 0x4 - core index']
  #allocation1 [shape = 'u32[144,128]{1,0:T(1,128)}', space=vmem, size = 0x12000, scoped, tag = 'internal scratch']
  %s0 = inlined_call_operand.vmem [shape: bf16[2,8,32], index: 0, kind: input, shape index: {}]
  %s1 = inlined_call_operand.vmem [shape: f32[2,8,32], index: 1, kind: input, shape index: {}]
  %s2 = inlined_call_operand.vmem [shape: s8[2,8,8], index: 2, kind: input, shape index: {}]
  %s3 = inlined_call_operand.vmem [shape: bf16[2,32,16], index: 3, kind: input, shape index: {}]
  %s4 = inlined_call_operand.vmem [shape: bf16[2,32,16], index: 4, kind: input, shape index: {}]
  %s5 = inlined_call_operand.vmem [shape: bf16[2,32,16], index: 5, kind: input, shape index: {}]
  %s6 = inlined_call_operand.vmem [shape: bf16[32,32], index: 6, kind: input, shape index: {}]
  %s7 = inlined_call_operand.vmem [shape: bf16[32,64], index: 7, kind: input, shape index: {}]
  %s8 = inlined_call_operand.vmem [shape: f32[1,64], index: 8, kind: input, shape index: {}]
  %s9 = inlined_call_operand.vmem [shape: bf16[64,32], index: 9, kind: input, shape index: {}]
  %s10 = inlined_call_operand.vmem [shape: f32[1,32], index: 10, kind: input, shape index: {}]
  %s11 = inlined_call_operand.vmem [shape: f32[1,32], index: 11, kind: input, shape index: {}]
  %s12 = inlined_call_operand.vmem [shape: f32[1,32], index: 12, kind: input, shape index: {}]
  %s13 = inlined_call_operand.vmem [shape: f32[1,32], index: 13, kind: input, shape index: {}]
  %s14 = inlined_call_operand.vmem [shape: f32[1,32], index: 14, kind: input, shape index: {}]
  %s15 = inlined_call_operand.vmem [shape: f32[1,32], index: 15, kind: input, shape index: {}]
  %s16 = inlined_call_operand.vmem [shape: f32[1,32], index: 16, kind: input, shape index: {}]
  %s17 = inlined_call_operand.hbm [shape: f32[2,8,32], index: 17, kind: output, shape index: {}]
  %s18 = sld [smem:[#allocation0]]
  $region78: #{tpu_custom_call.1} parent=0
    _
  %s20 = ssub.s32 1, %s18
  %s21 = scalar_select 0, %s20, %s18
  $region1: #{tpu_custom_call.1} parent=0
    #allocation2 [shape = 'u8[8192]{0}', space=vmem, size = 0x2000, scoped, tag = 'output window, operand 0, single buffered']
    #allocation3 [shape = 's32[1]{0}', space=sflag, size = 0x4, scoped, tag = 'scoped memory for tpu_custom_call.1']
    %22 = vsyncpa [#allocation3], 0
    // Predicated region
    $region2: #{tpu_custom_call.1} parent=1 // pred_check
      _
    $region3: #{tpu_custom_call.1} parent=1 // pred_check_branch
      %24 = sbr.rel (0) target = $region5
    $region4: #{tpu_custom_call.1} parent=1 // pred_region
      _
    $region5: #{tpu_custom_call.1} parent=1 // pred_fallthru
      _
    // Predicated region
    $region6: #{tpu_custom_call.1} parent=1 // pred_check
      _
    $region7: #{tpu_custom_call.1} parent=1 // pred_check_branch
      %26 = sbr.rel (0) target = $region9
    $region8: #{tpu_custom_call.1} parent=1 // pred_region
      _
    $region9: #{tpu_custom_call.1} parent=1 // pred_fallthru
      _
    // Predicated region
    $region10: #{tpu_custom_call.1} parent=1 // pred_check
      _
    $region11: #{tpu_custom_call.1} parent=1 // pred_check_branch
      %28 = sbr.rel (0) target = $region13
    $region12: #{tpu_custom_call.1} parent=1 // pred_region
      _
    $region13: #{tpu_custom_call.1} parent=1 // pred_fallthru
      _
    // Predicated region
    $region14: #{tpu_custom_call.1} parent=1 // pred_check
      _
    $region15: #{tpu_custom_call.1} parent=1 // pred_check_branch
      %30 = sbr.rel (0) target = $region17
    $region16: #{tpu_custom_call.1} parent=1 // pred_region
      _
    $region17: #{tpu_custom_call.1} parent=1 // pred_fallthru
      _
    // Predicated region
    $region18: #{tpu_custom_call.1} parent=1 // pred_check
      _
    $region19: #{tpu_custom_call.1} parent=1 // pred_check_branch
      %32 = sbr.rel (0) target = $region21
    $region20: #{tpu_custom_call.1} parent=1 // pred_region
      _
    $region21: #{tpu_custom_call.1} parent=1 // pred_fallthru
      _
    // Predicated region
    $region22: #{tpu_custom_call.1} parent=1 // pred_check
      _
    $region23: #{tpu_custom_call.1} parent=1 // pred_check_branch
      %34 = sbr.rel (0) target = $region25
    $region24: #{tpu_custom_call.1} parent=1 // pred_region
      _
    $region25: #{tpu_custom_call.1} parent=1 // pred_fallthru
      _
    // Predicated region
    $region26: #{tpu_custom_call.1} parent=1 // pred_check
      _
    $region27: #{tpu_custom_call.1} parent=1 // pred_check_branch
      %36 = sbr.rel (0) target = $region29
    $region28: #{tpu_custom_call.1} parent=1 // pred_region
      _
    $region29: #{tpu_custom_call.1} parent=1 // pred_fallthru
      _
    // Predicated region
    $region30: #{tpu_custom_call.1} parent=1 // pred_check
      _
    $region31: #{tpu_custom_call.1} parent=1 // pred_check_branch
      %38 = sbr.rel (0) target = $region33
    $region32: #{tpu_custom_call.1} parent=1 // pred_region
      _
    $region33: #{tpu_custom_call.1} parent=1 // pred_fallthru
      _
    // Predicated region
    $region34: #{tpu_custom_call.1} parent=1 // pred_check
      _
    $region35: #{tpu_custom_call.1} parent=1 // pred_check_branch
      %40 = sbr.rel (0) target = $region37
    $region36: #{tpu_custom_call.1} parent=1 // pred_region
      _
    $region37: #{tpu_custom_call.1} parent=1 // pred_fallthru
      _
    // Predicated region
    $region38: #{tpu_custom_call.1} parent=1 // pred_check
      _
    $region39: #{tpu_custom_call.1} parent=1 // pred_check_branch
      %42 = sbr.rel (0) target = $region41
    $region40: #{tpu_custom_call.1} parent=1 // pred_region
      _
    $region41: #{tpu_custom_call.1} parent=1 // pred_fallthru
      _
    // Predicated region
    $region42: #{tpu_custom_call.1} parent=1 // pred_check
      _
    $region43: #{tpu_custom_call.1} parent=1 // pred_check_branch
      %44 = sbr.rel (0) target = $region45
    $region44: #{tpu_custom_call.1} parent=1 // pred_region
      _
    $region45: #{tpu_custom_call.1} parent=1 // pred_fallthru
      _
    // Predicated region
    $region46: #{tpu_custom_call.1} parent=1 // pred_check
      _
    $region47: #{tpu_custom_call.1} parent=1 // pred_check_branch
      %46 = sbr.rel (0) target = $region49
    $region48: #{tpu_custom_call.1} parent=1 // pred_region
      _
    $region49: #{tpu_custom_call.1} parent=1 // pred_fallthru
      _
    // Predicated region
    $region50: #{tpu_custom_call.1} parent=1 // pred_check
      _
    $region51: #{tpu_custom_call.1} parent=1 // pred_check_branch
      %48 = sbr.rel (0) target = $region53
    $region52: #{tpu_custom_call.1} parent=1 // pred_region
      _
    $region53: #{tpu_custom_call.1} parent=1 // pred_fallthru
      _
    // Predicated region
    $region54: #{tpu_custom_call.1} parent=1 // pred_check
      _
    $region55: #{tpu_custom_call.1} parent=1 // pred_check_branch
      %50 = sbr.rel (0) target = $region57
    $region56: #{tpu_custom_call.1} parent=1 // pred_region
      _
    $region57: #{tpu_custom_call.1} parent=1 // pred_fallthru
      _
    // Predicated region
    $region58: #{tpu_custom_call.1} parent=1 // pred_check
      _
    $region59: #{tpu_custom_call.1} parent=1 // pred_check_branch
      %52 = sbr.rel (0) target = $region61
    $region60: #{tpu_custom_call.1} parent=1 // pred_region
      _
    $region61: #{tpu_custom_call.1} parent=1 // pred_fallthru
      _
    // Predicated region
    $region62: #{tpu_custom_call.1} parent=1 // pred_check
      _
    $region63: #{tpu_custom_call.1} parent=1 // pred_check_branch
      %54 = sbr.rel (0) target = $region65
    $region64: #{tpu_custom_call.1} parent=1 // pred_region
      _
    $region65: #{tpu_custom_call.1} parent=1 // pred_fallthru
      _
    // Predicated region
    $region66: #{tpu_custom_call.1} parent=1 // pred_check
      _
    $region67: #{tpu_custom_call.1} parent=1 // pred_check_branch
      %56 = sbr.rel (0) target = $region69
    $region68: #{tpu_custom_call.1} parent=1 // pred_region
      _
    $region69: #{tpu_custom_call.1} parent=1 // pred_fallthru
      _
    %v58 = vld [vmem:[%s1] sm:$0xff]
    %v59 = vld [vmem:[%s1 + $0x8] sm:$0xff]
    %v60 = vpack.c.bf16 %v59, %v58
    %v61 = vld [vmem:[%s0] sm:$0xf]
    %v62 = vld [vmem:[%s0 + $0x4] sm:$0xf]
    %v63 = vld [vmem:[%s2] sm:$0x3]
    %v64 = vld [vmem:[%s2 + $0x2] sm:$0x3]
    %v65 = vunpack.c.0.s8 %v63
    %v66 = vunpack.c.0.s8 %v64
    %v67 = vcvt.s32.f32 %v65
    %v68 = vcvt.s32.f32 %v66
    %v69 = vld [vmem:[%s3] sm:$0xf]
    %v70 = vld [vmem:[%s3 + $0x4] sm:$0xf]
    %v71 = vld [vmem:[%s3 + $0x8] sm:$0xf]
    %v72 = vld [vmem:[%s3 + $0xc] sm:$0xf]
    %v77 = vunpack.c.l.b16 %v69
    %v78 = vunpack.c.l.b16 %v70
    %v79 = vunpack.c.l.b16 %v71
    %v80 = vunpack.c.l.b16 %v72
    %v81 = vpack.c.b16 %v78, %v77
    %v82 = vpack.c.b16 %v80, %v79
    %vm85 = vcmask 261120
    %v87 = vsel %vm85, %v60, 0
    %89 = vmatprep.subr.bf16.mxu0 0
    %90 = vmatpush1.bf16.msra.mxu0 %v81
    %91 = vmatprep.subr.bf16.mxu0 0
    %92 = vmatpush1.bf16.msra.mxu0 %v82
    %93 = vmatprep.subr.bf16.mxu0 0
    %94 = vmatpush1.bf16.msra.mxu0 0
    %95 = vmatprep.subr.bf16.mxu0 0
    %96 = vmatpush1.bf16.msra.mxu0 0
    %97 = vmatprep.subr.bf16.mxu0 0
    %98 = vmatpush1.bf16.msra.mxu0 0
    %99 = vmatprep.subr.bf16.mxu0 0
    %100 = vmatpush1.bf16.msra.mxu0 0
    %101 = vmatprep.subr.bf16.mxu0 0
    %102 = vmatpush1.bf16.msra.mxu0 0
    %103 = vmatprep.subr.bf16.mxu0 0
    %104 = vmatpush1.bf16.msra.mxu0 0
    %105 = vmatprep.subr.bf16.mxu0 0
    %106 = vmatpush1.bf16.msra.mxu0 0
    %107 = vmatprep.subr.bf16.mxu0 0
    %108 = vmatpush1.bf16.msra.mxu0 0
    %109 = vmatprep.subr.bf16.mxu0 0
    %110 = vmatpush1.bf16.msra.mxu0 0
    %111 = vmatprep.subr.bf16.mxu0 0
    %112 = vmatpush1.bf16.msra.mxu0 0
    %113 = vmatprep.subr.bf16.mxu0 0
    %114 = vmatpush1.bf16.msra.mxu0 0
    %115 = vmatprep.subr.bf16.mxu0 0
    %116 = vmatpush1.bf16.msra.mxu0 0
    %117 = vmatprep.subr.bf16.mxu0 0
    %118 = vmatpush1.bf16.msra.mxu0 0
    %119 = vmatprep.subr.bf16.mxu0 0
    %120 = vmatpush1.bf16.msra.mxu0 0
    %121 = vmatprep.mubr.bf16.mxu0 0
    %122 = vmatmul.mubr.bf16.gmra.mrb[0].mxu0 %v87
    %v123 = vpop.f32.mrb[0].mxu0
    %v124 = vadd.f32 0.0, %v123
    %v125 = vpop.f32.mrb[0].mxu0
    %v126 = vpop.f32.mrb[0].mxu0
    %v127 = vadd.f32 0.0, %v126
    %v128 = vpop.f32.mrb[0].mxu0
    %129 = vdwg.mxu0
    %v130 = vmul.f32 %v124, 0.25
    %v131 = vmul.f32 %v127, 0.25
    %v132 = vld [vmem:[%s4] sm:$0xf]
    %v133 = vld [vmem:[%s4 + $0x4] sm:$0xf]
    %v134 = vld [vmem:[%s4 + $0x8] sm:$0xf]
    %v135 = vld [vmem:[%s4 + $0xc] sm:$0xf]
    %v138 = vunpack.c.l.b16 %v61
    %v139 = vunpack.c.l.b16 %v62
    %v140 = vpack.c.b16 %v139, %v138
    %v145 = vunpack.c.l.b16 %v132
    %v146 = vunpack.c.l.b16 %v133
    %v147 = vunpack.c.l.b16 %v134
    %v148 = vunpack.c.l.b16 %v135
    %v149 = vpack.c.b16 %v146, %v145
    %v150 = vpack.c.b16 %v148, %v147
    %v154 = vsel %vm85, %v140, 0
    %156 = vmatprep.subr.bf16.mxu0 0
    %157 = vmatpush1.bf16.msra.mxu0 %v149
    %158 = vmatprep.subr.bf16.mxu0 0
    %159 = vmatpush1.bf16.msra.mxu0 %v150
    %160 = vmatprep.subr.bf16.mxu0 0
    %161 = vmatpush1.bf16.msra.mxu0 0
    %162 = vmatprep.subr.bf16.mxu0 0
    %163 = vmatpush1.bf16.msra.mxu0 0
    %164 = vmatprep.subr.bf16.mxu0 0
    %165 = vmatpush1.bf16.msra.mxu0 0
    %166 = vmatprep.subr.bf16.mxu0 0
    %167 = vmatpush1.bf16.msra.mxu0 0
    %168 = vmatprep.subr.bf16.mxu0 0
    %169 = vmatpush1.bf16.msra.mxu0 0
    %170 = vmatprep.subr.bf16.mxu0 0
    %171 = vmatpush1.bf16.msra.mxu0 0
    %172 = vmatprep.subr.bf16.mxu0 0
    %173 = vmatpush1.bf16.msra.mxu0 0
    %174 = vmatprep.subr.bf16.mxu0 0
    %175 = vmatpush1.bf16.msra.mxu0 0
    %176 = vmatprep.subr.bf16.mxu0 0
    %177 = vmatpush1.bf16.msra.mxu0 0
    %178 = vmatprep.subr.bf16.mxu0 0
    %179 = vmatpush1.bf16.msra.mxu0 0
    %180 = vmatprep.subr.bf16.mxu0 0
    %181 = vmatpush1.bf16.msra.mxu0 0
    %182 = vmatprep.subr.bf16.mxu0 0
    %183 = vmatpush1.bf16.msra.mxu0 0
    %184 = vmatprep.subr.bf16.mxu0 0
    %185 = vmatpush1.bf16.msra.mxu0 0
    %186 = vmatprep.subr.bf16.mxu0 0
    %187 = vmatpush1.bf16.msra.mxu0 0
    %188 = vmatprep.mubr.bf16.mxu0 0
    %189 = vmatmul.mubr.bf16.gmra.mrb[0].mxu0 %v154
    %v190 = vpop.f32.mrb[0].mxu0
    %v191 = vadd.f32 0.0, %v190
    %v192 = vpop.f32.mrb[0].mxu0
    %v193 = vpop.f32.mrb[0].mxu0
    %v194 = vadd.f32 0.0, %v193
    %v195 = vpop.f32.mrb[0].mxu0
    %196 = vdwg.mxu0
    %v197 = vld [vmem:[%s5] sm:$0xf]
    %v198 = vld [vmem:[%s5 + $0x4] sm:$0xf]
    %v199 = vld [vmem:[%s5 + $0x8] sm:$0xf]
    %v200 = vld [vmem:[%s5 + $0xc] sm:$0xf]
    %v205 = vunpack.c.l.b16 %v197
    %v206 = vunpack.c.l.b16 %v198
    %v207 = vunpack.c.l.b16 %v199
    %v208 = vunpack.c.l.b16 %v200
    %v209 = vpack.c.b16 %v206, %v205
    %v210 = vpack.c.b16 %v208, %v207
    %213 = vmatprep.subr.bf16.mxu0 0
    %214 = vmatpush1.bf16.msra.mxu0 %v209
    %215 = vmatprep.subr.bf16.mxu0 0
    %216 = vmatpush1.bf16.msra.mxu0 %v210
    %217 = vmatprep.subr.bf16.mxu0 0
    %218 = vmatpush1.bf16.msra.mxu0 0
    %219 = vmatprep.subr.bf16.mxu0 0
    %220 = vmatpush1.bf16.msra.mxu0 0
    %221 = vmatprep.subr.bf16.mxu0 0
    %222 = vmatpush1.bf16.msra.mxu0 0
    %223 = vmatprep.subr.bf16.mxu0 0
    %224 = vmatpush1.bf16.msra.mxu0 0
    %225 = vmatprep.subr.bf16.mxu0 0
    %226 = vmatpush1.bf16.msra.mxu0 0
    %227 = vmatprep.subr.bf16.mxu0 0
    %228 = vmatpush1.bf16.msra.mxu0 0
    %229 = vmatprep.subr.bf16.mxu0 0
    %230 = vmatpush1.bf16.msra.mxu0 0
    %231 = vmatprep.subr.bf16.mxu0 0
    %232 = vmatpush1.bf16.msra.mxu0 0
    %233 = vmatprep.subr.bf16.mxu0 0
    %234 = vmatpush1.bf16.msra.mxu0 0
    %235 = vmatprep.subr.bf16.mxu0 0
    %236 = vmatpush1.bf16.msra.mxu0 0
    %237 = vmatprep.subr.bf16.mxu0 0
    %238 = vmatpush1.bf16.msra.mxu0 0
    %239 = vmatprep.subr.bf16.mxu0 0
    %240 = vmatpush1.bf16.msra.mxu0 0
    %241 = vmatprep.subr.bf16.mxu0 0
    %242 = vmatpush1.bf16.msra.mxu0 0
    %243 = vmatprep.subr.bf16.mxu0 0
    %244 = vmatpush1.bf16.msra.mxu0 0
    %245 = vmatprep.mubr.bf16.mxu0 0
    %246 = vmatmul.mubr.bf16.gmra.mrb[0].mxu0 %v154
    %v247 = vpop.f32.mrb[0].mxu0
    %v248 = vadd.f32 0.0, %v247
    %v249 = vpop.f32.mrb[0].mxu0
    %v250 = vpop.f32.mrb[0].mxu0
    %v251 = vadd.f32 0.0, %v250
    %v252 = vpop.f32.mrb[0].mxu0
    %253 = vdwg.mxu0
    %v254 = vpack.c.bf16 %v130, %v130
    %v255 = vpack.c.bf16 %v131, %v131
    %v256 = vpack.c.bf16 %v191, %v191
    %v257 = vpack.c.bf16 %v194, %v194
    %v258 = vpack.c.bf16 %v248, %v248
    %v259 = vpack.c.bf16 %v251, %v251
    %vm260 = vcmask 130048
    %v262 = vsel %vm260, %v254, 0
    %v265 = vsel %vm260, %v256, 0
    %267 = vmatprep.subr.bf16.mxu0 0
    %268 = vmatpush1.bf16.xpose.msra.mxu0 %v265
    %269 = vmatprep.subr.bf16.mxu0 0
    %270 = vmatpush1.bf16.xpose.msra.mxu0 0
    %271 = vmatprep.subr.bf16.mxu0 0
    %272 = vmatpush1.bf16.xpose.msra.mxu0 0
    %273 = vmatprep.subr.bf16.mxu0 0
    %274 = vmatpush1.bf16.xpose.msra.mxu0 0
    %275 = vmatprep.subr.bf16.mxu0 0
    %276 = vmatpush1.bf16.xpose.msra.mxu0 0
    %277 = vmatprep.subr.bf16.mxu0 0
    %278 = vmatpush1.bf16.xpose.msra.mxu0 0
    %279 = vmatprep.subr.bf16.mxu0 0
    %280 = vmatpush1.bf16.xpose.msra.mxu0 0
    %281 = vmatprep.subr.bf16.mxu0 0
    %282 = vmatpush1.bf16.xpose.msra.mxu0 0
    %283 = vmatprep.subr.bf16.mxu0 0
    %284 = vmatpush1.bf16.xpose.msra.mxu0 0
    %285 = vmatprep.subr.bf16.mxu0 0
    %286 = vmatpush1.bf16.xpose.msra.mxu0 0
    %287 = vmatprep.subr.bf16.mxu0 0
    %288 = vmatpush1.bf16.xpose.msra.mxu0 0
    %289 = vmatprep.subr.bf16.mxu0 0
    %290 = vmatpush1.bf16.xpose.msra.mxu0 0
    %291 = vmatprep.subr.bf16.mxu0 0
    %292 = vmatpush1.bf16.xpose.msra.mxu0 0
    %293 = vmatprep.subr.bf16.mxu0 0
    %294 = vmatpush1.bf16.xpose.msra.mxu0 0
    %295 = vmatprep.subr.bf16.mxu0 0
    %296 = vmatpush1.bf16.xpose.msra.mxu0 0
    %297 = vmatprep.subr.bf16.mxu0 0
    %298 = vmatpush1.bf16.xpose.msra.mxu0 0
    %299 = vmatprep.mubr.bf16.mxu0 0
    %300 = vmatmul.mubr.bf16.gmra.mrb[0].mxu0 %v262
    %v301 = vpop.f32.mrb[0].mxu0
    %v302 = vadd.f32 0.0, %v301
    %v303 = vpop.f32.mrb[0].mxu0
    %v304 = vpop.f32.mrb[0].mxu0
    %v305 = vpop.f32.mrb[0].mxu0
    %306 = vdwg.mxu0
    %v308 = vsel %vm260, %v255, 0
    %v311 = vsel %vm260, %v257, 0
    %313 = vmatprep.subr.bf16.mxu0 0
    %314 = vmatpush1.bf16.xpose.msra.mxu0 %v311
    %315 = vmatprep.subr.bf16.mxu0 0
    %316 = vmatpush1.bf16.xpose.msra.mxu0 0
    %317 = vmatprep.subr.bf16.mxu0 0
    %318 = vmatpush1.bf16.xpose.msra.mxu0 0
    %319 = vmatprep.subr.bf16.mxu0 0
    %320 = vmatpush1.bf16.xpose.msra.mxu0 0
    %321 = vmatprep.subr.bf16.mxu0 0
    %322 = vmatpush1.bf16.xpose.msra.mxu0 0
    %323 = vmatprep.subr.bf16.mxu0 0
    %324 = vmatpush1.bf16.xpose.msra.mxu0 0
    %325 = vmatprep.subr.bf16.mxu0 0
    %326 = vmatpush1.bf16.xpose.msra.mxu0 0
    %327 = vmatprep.subr.bf16.mxu0 0
    %328 = vmatpush1.bf16.xpose.msra.mxu0 0
    %329 = vmatprep.subr.bf16.mxu0 0
    %330 = vmatpush1.bf16.xpose.msra.mxu0 0
    %331 = vmatprep.subr.bf16.mxu0 0
    %332 = vmatpush1.bf16.xpose.msra.mxu0 0
    %333 = vmatprep.subr.bf16.mxu0 0
    %334 = vmatpush1.bf16.xpose.msra.mxu0 0
    %335 = vmatprep.subr.bf16.mxu0 0
    %336 = vmatpush1.bf16.xpose.msra.mxu0 0
    %337 = vmatprep.subr.bf16.mxu0 0
    %338 = vmatpush1.bf16.xpose.msra.mxu0 0
    %339 = vmatprep.subr.bf16.mxu0 0
    %340 = vmatpush1.bf16.xpose.msra.mxu0 0
    %341 = vmatprep.subr.bf16.mxu0 0
    %342 = vmatpush1.bf16.xpose.msra.mxu0 0
    %343 = vmatprep.subr.bf16.mxu0 0
    %344 = vmatpush1.bf16.xpose.msra.mxu0 0
    %345 = vmatprep.mubr.bf16.mxu0 0
    %346 = vmatmul.mubr.bf16.gmra.mrb[0].mxu0 %v308
    %v347 = vpop.f32.mrb[0].mxu0
    %v348 = vadd.f32 0.0, %v347
    %v349 = vpop.f32.mrb[0].mxu0
    %v350 = vpop.f32.mrb[0].mxu0
    %v351 = vpop.f32.mrb[0].mxu0
    %352 = vdwg.mxu0
    %vm353 = vcmp.gt.f32.partialorder %v67, 0.0
    %vm354 = vcmp.gt.f32.partialorder %v68, 0.0
    %v355 = vsel %vm353, %v302, -1e+09
    %v356 = vsel %vm354, %v348, -1e+09
    %vm357 = vcmask 64512
    %v358 = vsel %vm357, %v355, -inf
    %359 = vmax.xlane.f32.xlu0 %v358
    %v360 = vpop.xlane.xlu0 %359
    %v361 = vsel %vm357, %v356, -inf
    %362 = vmax.xlane.f32.xlu0 %v361
    %v363 = vpop.xlane.xlu0 %362
    %v364 = vsub.f32 %v355, %v360
    %v365 = vsub.f32 %v356, %v363
    %v366 = vmul.f32 %v364, 1.442695
    %v367 = vpow.pop %v366
    %v368 = vmul.f32 %v365, 1.442695
    %v369 = vpow.pop %v368
    %v370 = vsel %vm357, %v367, 0.0
    %371 = vadd.xlane.f32.xlu0 %v370
    %v372 = vpop.xlane.xlu0 %371
    %v373 = vsel %vm357, %v369, 0.0
    %374 = vadd.xlane.f32.xlu0 %v373
    %v375 = vpop.xlane.xlu0 %374
    %v376 = vrcp.pop %v372
    %v377 = vrcp.pop %v375
    %v378 = vmul.f32 %v367, %v376
    %v379 = vmul.f32 %v369, %v377
    %v380 = vpack.c.bf16 %v378, %v378
    %v381 = vpack.c.bf16 %v379, %v379
    %v383 = vsel %vm357, %v380, 0
    %vm385 = vcmask 1043456
    %v387 = vsel %vm385, %v258, 0
    %389 = vmatprep.subr.bf16.mxu0 0
    %390 = vmatpush1.bf16.msra.mxu0 %v387
    %391 = vmatprep.subr.bf16.mxu0 0
    %392 = vmatpush1.bf16.msra.mxu0 0
    %393 = vmatprep.subr.bf16.mxu0 0
    %394 = vmatpush1.bf16.msra.mxu0 0
    %395 = vmatprep.subr.bf16.mxu0 0
    %396 = vmatpush1.bf16.msra.mxu0 0
    %397 = vmatprep.subr.bf16.mxu0 0
    %398 = vmatpush1.bf16.msra.mxu0 0
    %399 = vmatprep.subr.bf16.mxu0 0
    %400 = vmatpush1.bf16.msra.mxu0 0
    %401 = vmatprep.subr.bf16.mxu0 0
    %402 = vmatpush1.bf16.msra.mxu0 0
    %403 = vmatprep.subr.bf16.mxu0 0
    %404 = vmatpush1.bf16.msra.mxu0 0
    %405 = vmatprep.subr.bf16.mxu0 0
    %406 = vmatpush1.bf16.msra.mxu0 0
    %407 = vmatprep.subr.bf16.mxu0 0
    %408 = vmatpush1.bf16.msra.mxu0 0
    %409 = vmatprep.subr.bf16.mxu0 0
    %410 = vmatpush1.bf16.msra.mxu0 0
    %411 = vmatprep.subr.bf16.mxu0 0
    %412 = vmatpush1.bf16.msra.mxu0 0
    %413 = vmatprep.subr.bf16.mxu0 0
    %414 = vmatpush1.bf16.msra.mxu0 0
    %415 = vmatprep.subr.bf16.mxu0 0
    %416 = vmatpush1.bf16.msra.mxu0 0
    %417 = vmatprep.subr.bf16.mxu0 0
    %418 = vmatpush1.bf16.msra.mxu0 0
    %419 = vmatprep.subr.bf16.mxu0 0
    %420 = vmatpush1.bf16.msra.mxu0 0
    %421 = vmatprep.mubr.bf16.mxu0 0
    %422 = vmatmul.mubr.bf16.gmra.mrb[0].mxu0 %v383
    %v423 = vpop.f32.mrb[0].mxu0
    %v424 = vadd.f32 0.0, %v423
    %v425 = vpop.f32.mrb[0].mxu0
    %v426 = vpop.f32.mrb[0].mxu0
    %v427 = vpop.f32.mrb[0].mxu0
    %428 = vdwg.mxu0
    %v430 = vsel %vm357, %v381, 0
    %v433 = vsel %vm385, %v259, 0
    %435 = vmatprep.subr.bf16.mxu0 0
    %436 = vmatpush1.bf16.msra.mxu0 %v433
    %437 = vmatprep.subr.bf16.mxu0 0
    %438 = vmatpush1.bf16.msra.mxu0 0
    %439 = vmatprep.subr.bf16.mxu0 0
    %440 = vmatpush1.bf16.msra.mxu0 0
    %441 = vmatprep.subr.bf16.mxu0 0
    %442 = vmatpush1.bf16.msra.mxu0 0
    %443 = vmatprep.subr.bf16.mxu0 0
    %444 = vmatpush1.bf16.msra.mxu0 0
    %445 = vmatprep.subr.bf16.mxu0 0
    %446 = vmatpush1.bf16.msra.mxu0 0
    %447 = vmatprep.subr.bf16.mxu0 0
    %448 = vmatpush1.bf16.msra.mxu0 0
    %449 = vmatprep.subr.bf16.mxu0 0
    %450 = vmatpush1.bf16.msra.mxu0 0
    %451 = vmatprep.subr.bf16.mxu0 0
    %452 = vmatpush1.bf16.msra.mxu0 0
    %453 = vmatprep.subr.bf16.mxu0 0
    %454 = vmatpush1.bf16.msra.mxu0 0
    %455 = vmatprep.subr.bf16.mxu0 0
    %456 = vmatpush1.bf16.msra.mxu0 0
    %457 = vmatprep.subr.bf16.mxu0 0
    %458 = vmatpush1.bf16.msra.mxu0 0
    %459 = vmatprep.subr.bf16.mxu0 0
    %460 = vmatpush1.bf16.msra.mxu0 0
    %461 = vmatprep.subr.bf16.mxu0 0
    %462 = vmatpush1.bf16.msra.mxu0 0
    %463 = vmatprep.subr.bf16.mxu0 0
    %464 = vmatpush1.bf16.msra.mxu0 0
    %465 = vmatprep.subr.bf16.mxu0 0
    %466 = vmatpush1.bf16.msra.mxu0 0
    %467 = vmatprep.mubr.bf16.mxu0 0
    %468 = vmatmul.mubr.bf16.gmra.mrb[0].mxu0 %v430
    %v469 = vpop.f32.mrb[0].mxu0
    %v470 = vadd.f32 0.0, %v469
    %v471 = vpop.f32.mrb[0].mxu0
    %v472 = vpop.f32.mrb[0].mxu0
    %v473 = vpop.f32.mrb[0].mxu0
    %474 = vdwg.mxu0
    %s475 = scalar_lea.vmem %s3, 16
    %v476 = vld [vmem:[%s475] sm:$0xf]
    %v477 = vld [vmem:[%s475 + $0x4] sm:$0xf]
    %v478 = vld [vmem:[%s475 + $0x8] sm:$0xf]
    %v479 = vld [vmem:[%s475 + $0xc] sm:$0xf]
    %v484 = vunpack.c.l.b16 %v476
    %v485 = vunpack.c.l.b16 %v477
    %v486 = vunpack.c.l.b16 %v478
    %v487 = vunpack.c.l.b16 %v479
    %v488 = vpack.c.b16 %v485, %v484
    %v489 = vpack.c.b16 %v487, %v486
    %492 = vmatprep.subr.bf16.mxu0 0
    %493 = vmatpush1.bf16.msra.mxu0 %v488
    %494 = vmatprep.subr.bf16.mxu0 0
    %495 = vmatpush1.bf16.msra.mxu0 %v489
    %496 = vmatprep.subr.bf16.mxu0 0
    %497 = vmatpush1.bf16.msra.mxu0 0
    %498 = vmatprep.subr.bf16.mxu0 0
    %499 = vmatpush1.bf16.msra.mxu0 0
    %500 = vmatprep.subr.bf16.mxu0 0
    %501 = vmatpush1.bf16.msra.mxu0 0
    %502 = vmatprep.subr.bf16.mxu0 0
    %503 = vmatpush1.bf16.msra.mxu0 0
    %504 = vmatprep.subr.bf16.mxu0 0
    %505 = vmatpush1.bf16.msra.mxu0 0
    %506 = vmatprep.subr.bf16.mxu0 0
    %507 = vmatpush1.bf16.msra.mxu0 0
    %508 = vmatprep.subr.bf16.mxu0 0
    %509 = vmatpush1.bf16.msra.mxu0 0
    %510 = vmatprep.subr.bf16.mxu0 0
    %511 = vmatpush1.bf16.msra.mxu0 0
    %512 = vmatprep.subr.bf16.mxu0 0
    %513 = vmatpush1.bf16.msra.mxu0 0
    %514 = vmatprep.subr.bf16.mxu0 0
    %515 = vmatpush1.bf16.msra.mxu0 0
    %516 = vmatprep.subr.bf16.mxu0 0
    %517 = vmatpush1.bf16.msra.mxu0 0
    %518 = vmatprep.subr.bf16.mxu0 0
    %519 = vmatpush1.bf16.msra.mxu0 0
    %520 = vmatprep.subr.bf16.mxu0 0
    %521 = vmatpush1.bf16.msra.mxu0 0
    %522 = vmatprep.subr.bf16.mxu0 0
    %523 = vmatpush1.bf16.msra.mxu0 0
    %524 = vmatprep.mubr.bf16.mxu0 0
    %525 = vmatmul.mubr.bf16.gmra.mrb[0].mxu0 %v87
    %v526 = vpop.f32.mrb[0].mxu0
    %v527 = vadd.f32 0.0, %v526
    %v528 = vpop.f32.mrb[0].mxu0
    %v529 = vpop.f32.mrb[0].mxu0
    %v530 = vadd.f32 0.0, %v529
    %v531 = vpop.f32.mrb[0].mxu0
    %532 = vdwg.mxu0
    %v533 = vmul.f32 %v527, 0.25
    %v534 = vmul.f32 %v530, 0.25
    %s535 = scalar_lea.vmem %s4, 16
    %v536 = vld [vmem:[%s535] sm:$0xf]
    %v537 = vld [vmem:[%s535 + $0x4] sm:$0xf]
    %v538 = vld [vmem:[%s535 + $0x8] sm:$0xf]
    %v539 = vld [vmem:[%s535 + $0xc] sm:$0xf]
    %v544 = vunpack.c.l.b16 %v536
    %v545 = vunpack.c.l.b16 %v537
    %v546 = vunpack.c.l.b16 %v538
    %v547 = vunpack.c.l.b16 %v539
    %v548 = vpack.c.b16 %v545, %v544
    %v549 = vpack.c.b16 %v547, %v546
    %552 = vmatprep.subr.bf16.mxu0 0
    %553 = vmatpush1.bf16.msra.mxu0 %v548
    %554 = vmatprep.subr.bf16.mxu0 0
    %555 = vmatpush1.bf16.msra.mxu0 %v549
    %556 = vmatprep.subr.bf16.mxu0 0
    %557 = vmatpush1.bf16.msra.mxu0 0
    %558 = vmatprep.subr.bf16.mxu0 0
    %559 = vmatpush1.bf16.msra.mxu0 0
    %560 = vmatprep.subr.bf16.mxu0 0
    %561 = vmatpush1.bf16.msra.mxu0 0
    %562 = vmatprep.subr.bf16.mxu0 0
    %563 = vmatpush1.bf16.msra.mxu0 0
    %564 = vmatprep.subr.bf16.mxu0 0
    %565 = vmatpush1.bf16.msra.mxu0 0
    %566 = vmatprep.subr.bf16.mxu0 0
    %567 = vmatpush1.bf16.msra.mxu0 0
    %568 = vmatprep.subr.bf16.mxu0 0
    %569 = vmatpush1.bf16.msra.mxu0 0
    %570 = vmatprep.subr.bf16.mxu0 0
    %571 = vmatpush1.bf16.msra.mxu0 0
    %572 = vmatprep.subr.bf16.mxu0 0
    %573 = vmatpush1.bf16.msra.mxu0 0
    %574 = vmatprep.subr.bf16.mxu0 0
    %575 = vmatpush1.bf16.msra.mxu0 0
    %576 = vmatprep.subr.bf16.mxu0 0
    %577 = vmatpush1.bf16.msra.mxu0 0
    %578 = vmatprep.subr.bf16.mxu0 0
    %579 = vmatpush1.bf16.msra.mxu0 0
    %580 = vmatprep.subr.bf16.mxu0 0
    %581 = vmatpush1.bf16.msra.mxu0 0
    %582 = vmatprep.subr.bf16.mxu0 0
    %583 = vmatpush1.bf16.msra.mxu0 0
    %584 = vmatprep.mubr.bf16.mxu0 0
    %585 = vmatmul.mubr.bf16.gmra.mrb[0].mxu0 %v154
    %v586 = vpop.f32.mrb[0].mxu0
    %v587 = vadd.f32 0.0, %v586
    %v588 = vpop.f32.mrb[0].mxu0
    %v589 = vpop.f32.mrb[0].mxu0
    %v590 = vadd.f32 0.0, %v589
    %v591 = vpop.f32.mrb[0].mxu0
    %592 = vdwg.mxu0
    %s593 = scalar_lea.vmem %s5, 16
    %v594 = vld [vmem:[%s593] sm:$0xf]
    %v595 = vld [vmem:[%s593 + $0x4] sm:$0xf]
    %v596 = vld [vmem:[%s593 + $0x8] sm:$0xf]
    %v597 = vld [vmem:[%s593 + $0xc] sm:$0xf]
    %v602 = vunpack.c.l.b16 %v594
    %v603 = vunpack.c.l.b16 %v595
    %v604 = vunpack.c.l.b16 %v596
    %v605 = vunpack.c.l.b16 %v597
    %v606 = vpack.c.b16 %v603, %v602
    %v607 = vpack.c.b16 %v605, %v604
    %610 = vmatprep.subr.bf16.mxu0 0
    %611 = vmatpush1.bf16.msra.mxu0 %v606
    %612 = vmatprep.subr.bf16.mxu0 0
    %613 = vmatpush1.bf16.msra.mxu0 %v607
    %614 = vmatprep.subr.bf16.mxu0 0
    %615 = vmatpush1.bf16.msra.mxu0 0
    %616 = vmatprep.subr.bf16.mxu0 0
    %617 = vmatpush1.bf16.msra.mxu0 0
    %618 = vmatprep.subr.bf16.mxu0 0
    %619 = vmatpush1.bf16.msra.mxu0 0
    %620 = vmatprep.subr.bf16.mxu0 0
    %621 = vmatpush1.bf16.msra.mxu0 0
    %622 = vmatprep.subr.bf16.mxu0 0
    %623 = vmatpush1.bf16.msra.mxu0 0
    %624 = vmatprep.subr.bf16.mxu0 0
    %625 = vmatpush1.bf16.msra.mxu0 0
    %626 = vmatprep.subr.bf16.mxu0 0
    %627 = vmatpush1.bf16.msra.mxu0 0
    %628 = vmatprep.subr.bf16.mxu0 0
    %629 = vmatpush1.bf16.msra.mxu0 0
    %630 = vmatprep.subr.bf16.mxu0 0
    %631 = vmatpush1.bf16.msra.mxu0 0
    %632 = vmatprep.subr.bf16.mxu0 0
    %633 = vmatpush1.bf16.msra.mxu0 0
    %634 = vmatprep.subr.bf16.mxu0 0
    %635 = vmatpush1.bf16.msra.mxu0 0
    %636 = vmatprep.subr.bf16.mxu0 0
    %637 = vmatpush1.bf16.msra.mxu0 0
    %638 = vmatprep.subr.bf16.mxu0 0
    %639 = vmatpush1.bf16.msra.mxu0 0
    %640 = vmatprep.subr.bf16.mxu0 0
    %641 = vmatpush1.bf16.msra.mxu0 0
    %642 = vmatprep.mubr.bf16.mxu0 0
    %643 = vmatmul.mubr.bf16.gmra.mrb[0].mxu0 %v154
    %v644 = vpop.f32.mrb[0].mxu0
    %v645 = vadd.f32 0.0, %v644
    %v646 = vpop.f32.mrb[0].mxu0
    %v647 = vpop.f32.mrb[0].mxu0
    %v648 = vadd.f32 0.0, %v647
    %v649 = vpop.f32.mrb[0].mxu0
    %650 = vdwg.mxu0
    %v651 = vpack.c.bf16 %v533, %v533
    %v652 = vpack.c.bf16 %v534, %v534
    %v653 = vpack.c.bf16 %v587, %v587
    %v654 = vpack.c.bf16 %v590, %v590
    %v655 = vpack.c.bf16 %v645, %v645
    %v656 = vpack.c.bf16 %v648, %v648
    %v658 = vsel %vm260, %v651, 0
    %v661 = vsel %vm260, %v653, 0
    %663 = vmatprep.subr.bf16.mxu0 0
    %664 = vmatpush1.bf16.xpose.msra.mxu0 %v661
    %665 = vmatprep.subr.bf16.mxu0 0
    %666 = vmatpush1.bf16.xpose.msra.mxu0 0
    %667 = vmatprep.subr.bf16.mxu0 0
    %668 = vmatpush1.bf16.xpose.msra.mxu0 0
    %669 = vmatprep.subr.bf16.mxu0 0
    %670 = vmatpush1.bf16.xpose.msra.mxu0 0
    %671 = vmatprep.subr.bf16.mxu0 0
    %672 = vmatpush1.bf16.xpose.msra.mxu0 0
    %673 = vmatprep.subr.bf16.mxu0 0
    %674 = vmatpush1.bf16.xpose.msra.mxu0 0
    %675 = vmatprep.subr.bf16.mxu0 0
    %676 = vmatpush1.bf16.xpose.msra.mxu0 0
    %677 = vmatprep.subr.bf16.mxu0 0
    %678 = vmatpush1.bf16.xpose.msra.mxu0 0
    %679 = vmatprep.subr.bf16.mxu0 0
    %680 = vmatpush1.bf16.xpose.msra.mxu0 0
    %681 = vmatprep.subr.bf16.mxu0 0
    %682 = vmatpush1.bf16.xpose.msra.mxu0 0
    %683 = vmatprep.subr.bf16.mxu0 0
    %684 = vmatpush1.bf16.xpose.msra.mxu0 0
    %685 = vmatprep.subr.bf16.mxu0 0
    %686 = vmatpush1.bf16.xpose.msra.mxu0 0
    %687 = vmatprep.subr.bf16.mxu0 0
    %688 = vmatpush1.bf16.xpose.msra.mxu0 0
    %689 = vmatprep.subr.bf16.mxu0 0
    %690 = vmatpush1.bf16.xpose.msra.mxu0 0
    %691 = vmatprep.subr.bf16.mxu0 0
    %692 = vmatpush1.bf16.xpose.msra.mxu0 0
    %693 = vmatprep.subr.bf16.mxu0 0
    %694 = vmatpush1.bf16.xpose.msra.mxu0 0
    %695 = vmatprep.mubr.bf16.mxu0 0
    %696 = vmatmul.mubr.bf16.gmra.mrb[0].mxu0 %v658
    %v697 = vpop.f32.mrb[0].mxu0
    %v698 = vadd.f32 0.0, %v697
    %v699 = vpop.f32.mrb[0].mxu0
    %v700 = vpop.f32.mrb[0].mxu0
    %v701 = vpop.f32.mrb[0].mxu0
    %702 = vdwg.mxu0
    %v704 = vsel %vm260, %v652, 0
    %v707 = vsel %vm260, %v654, 0
    %709 = vmatprep.subr.bf16.mxu0 0
    %710 = vmatpush1.bf16.xpose.msra.mxu0 %v707
    %711 = vmatprep.subr.bf16.mxu0 0
    %712 = vmatpush1.bf16.xpose.msra.mxu0 0
    %713 = vmatprep.subr.bf16.mxu0 0
    %714 = vmatpush1.bf16.xpose.msra.mxu0 0
    %715 = vmatprep.subr.bf16.mxu0 0
    %716 = vmatpush1.bf16.xpose.msra.mxu0 0
    %717 = vmatprep.subr.bf16.mxu0 0
    %718 = vmatpush1.bf16.xpose.msra.mxu0 0
    %719 = vmatprep.subr.bf16.mxu0 0
    %720 = vmatpush1.bf16.xpose.msra.mxu0 0
    %721 = vmatprep.subr.bf16.mxu0 0
    %722 = vmatpush1.bf16.xpose.msra.mxu0 0
    %723 = vmatprep.subr.bf16.mxu0 0
    %724 = vmatpush1.bf16.xpose.msra.mxu0 0
    %725 = vmatprep.subr.bf16.mxu0 0
    %726 = vmatpush1.bf16.xpose.msra.mxu0 0
    %727 = vmatprep.subr.bf16.mxu0 0
    %728 = vmatpush1.bf16.xpose.msra.mxu0 0
    %729 = vmatprep.subr.bf16.mxu0 0
    %730 = vmatpush1.bf16.xpose.msra.mxu0 0
    %731 = vmatprep.subr.bf16.mxu0 0
    %732 = vmatpush1.bf16.xpose.msra.mxu0 0
    %733 = vmatprep.subr.bf16.mxu0 0
    %734 = vmatpush1.bf16.xpose.msra.mxu0 0
    %735 = vmatprep.subr.bf16.mxu0 0
    %736 = vmatpush1.bf16.xpose.msra.mxu0 0
    %737 = vmatprep.subr.bf16.mxu0 0
    %738 = vmatpush1.bf16.xpose.msra.mxu0 0
    %739 = vmatprep.subr.bf16.mxu0 0
    %740 = vmatpush1.bf16.xpose.msra.mxu0 0
    %741 = vmatprep.mubr.bf16.mxu0 0
    %742 = vmatmul.mubr.bf16.gmra.mrb[0].mxu0 %v704
    %v743 = vpop.f32.mrb[0].mxu0
    %v744 = vadd.f32 0.0, %v743
    %v745 = vpop.f32.mrb[0].mxu0
    %v746 = vpop.f32.mrb[0].mxu0
    %v747 = vpop.f32.mrb[0].mxu0
    %748 = vdwg.mxu0
    %v749 = vsel %vm353, %v698, -1e+09
    %v750 = vsel %vm354, %v744, -1e+09
    %v751 = vsel %vm357, %v749, -inf
    %752 = vmax.xlane.f32.xlu0 %v751
    %v753 = vpop.xlane.xlu0 %752
    %v754 = vsel %vm357, %v750, -inf
    %755 = vmax.xlane.f32.xlu0 %v754
    %v756 = vpop.xlane.xlu0 %755
    %v757 = vsub.f32 %v749, %v753
    %v758 = vsub.f32 %v750, %v756
    %v759 = vmul.f32 %v757, 1.442695
    %v760 = vpow.pop %v759
    %v761 = vmul.f32 %v758, 1.442695
    %v762 = vpow.pop %v761
    %v763 = vsel %vm357, %v760, 0.0
    %764 = vadd.xlane.f32.xlu0 %v763
    %v765 = vpop.xlane.xlu0 %764
    %v766 = vsel %vm357, %v762, 0.0
    %767 = vadd.xlane.f32.xlu0 %v766
    %v768 = vpop.xlane.xlu0 %767
    %v769 = vrcp.pop %v765
    %v770 = vrcp.pop %v768
    %v771 = vmul.f32 %v760, %v769
    %v772 = vmul.f32 %v762, %v770
    %v773 = vpack.c.bf16 %v771, %v771
    %v774 = vpack.c.bf16 %v772, %v772
    %v776 = vsel %vm357, %v773, 0
    %v779 = vsel %vm385, %v655, 0
    %781 = vmatprep.subr.bf16.mxu0 0
    %782 = vmatpush1.bf16.msra.mxu0 %v779
    %783 = vmatprep.subr.bf16.mxu0 0
    %784 = vmatpush1.bf16.msra.mxu0 0
    %785 = vmatprep.subr.bf16.mxu0 0
    %786 = vmatpush1.bf16.msra.mxu0 0
    %787 = vmatprep.subr.bf16.mxu0 0
    %788 = vmatpush1.bf16.msra.mxu0 0
    %789 = vmatprep.subr.bf16.mxu0 0
    %790 = vmatpush1.bf16.msra.mxu0 0
    %791 = vmatprep.subr.bf16.mxu0 0
    %792 = vmatpush1.bf16.msra.mxu0 0
    %793 = vmatprep.subr.bf16.mxu0 0
    %794 = vmatpush1.bf16.msra.mxu0 0
    %795 = vmatprep.subr.bf16.mxu0 0
    %796 = vmatpush1.bf16.msra.mxu0 0
    %797 = vmatprep.subr.bf16.mxu0 0
    %798 = vmatpush1.bf16.msra.mxu0 0
    %799 = vmatprep.subr.bf16.mxu0 0
    %800 = vmatpush1.bf16.msra.mxu0 0
    %801 = vmatprep.subr.bf16.mxu0 0
    %802 = vmatpush1.bf16.msra.mxu0 0
    %803 = vmatprep.subr.bf16.mxu0 0
    %804 = vmatpush1.bf16.msra.mxu0 0
    %805 = vmatprep.subr.bf16.mxu0 0
    %806 = vmatpush1.bf16.msra.mxu0 0
    %807 = vmatprep.subr.bf16.mxu0 0
    %808 = vmatpush1.bf16.msra.mxu0 0
    %809 = vmatprep.subr.bf16.mxu0 0
    %810 = vmatpush1.bf16.msra.mxu0 0
    %811 = vmatprep.subr.bf16.mxu0 0
    %812 = vmatpush1.bf16.msra.mxu0 0
    %813 = vmatprep.mubr.bf16.mxu0 0
    %814 = vmatmul.mubr.bf16.gmra.mrb[0].mxu0 %v776
    %v815 = vpop.f32.mrb[0].mxu0
    %v816 = vadd.f32 0.0, %v815
    %v817 = vpop.f32.mrb[0].mxu0
    %v818 = vpop.f32.mrb[0].mxu0
    %v819 = vpop.f32.mrb[0].mxu0
    %820 = vdwg.mxu0
    %v822 = vsel %vm357, %v774, 0
    %v825 = vsel %vm385, %v656, 0
    %827 = vmatprep.subr.bf16.mxu0 0
    %828 = vmatpush1.bf16.msra.mxu0 %v825
    %829 = vmatprep.subr.bf16.mxu0 0
    %830 = vmatpush1.bf16.msra.mxu0 0
    %831 = vmatprep.subr.bf16.mxu0 0
    %832 = vmatpush1.bf16.msra.mxu0 0
    %833 = vmatprep.subr.bf16.mxu0 0
    %834 = vmatpush1.bf16.msra.mxu0 0
    %835 = vmatprep.subr.bf16.mxu0 0
    %836 = vmatpush1.bf16.msra.mxu0 0
    %837 = vmatprep.subr.bf16.mxu0 0
    %838 = vmatpush1.bf16.msra.mxu0 0
    %839 = vmatprep.subr.bf16.mxu0 0
    %840 = vmatpush1.bf16.msra.mxu0 0
    %841 = vmatprep.subr.bf16.mxu0 0
    %842 = vmatpush1.bf16.msra.mxu0 0
    %843 = vmatprep.subr.bf16.mxu0 0
    %844 = vmatpush1.bf16.msra.mxu0 0
    %845 = vmatprep.subr.bf16.mxu0 0
    %846 = vmatpush1.bf16.msra.mxu0 0
    %847 = vmatprep.subr.bf16.mxu0 0
    %848 = vmatpush1.bf16.msra.mxu0 0
    %849 = vmatprep.subr.bf16.mxu0 0
    %850 = vmatpush1.bf16.msra.mxu0 0
    %851 = vmatprep.subr.bf16.mxu0 0
    %852 = vmatpush1.bf16.msra.mxu0 0
    %853 = vmatprep.subr.bf16.mxu0 0
    %854 = vmatpush1.bf16.msra.mxu0 0
    %855 = vmatprep.subr.bf16.mxu0 0
    %856 = vmatpush1.bf16.msra.mxu0 0
    %857 = vmatprep.subr.bf16.mxu0 0
    %858 = vmatpush1.bf16.msra.mxu0 0
    %859 = vmatprep.mubr.bf16.mxu0 0
    %860 = vmatmul.mubr.bf16.gmra.mrb[0].mxu0 %v822
    %v861 = vpop.f32.mrb[0].mxu0
    %v862 = vadd.f32 0.0, %v861
    %v863 = vpop.f32.mrb[0].mxu0
    %v864 = vpop.f32.mrb[0].mxu0
    %v865 = vpop.f32.mrb[0].mxu0
    %866 = vdwg.mxu0
    %869 = vrot.lane.b32.xlu0 %v816, 16
    %v870 = vpop.permute.xlu0 %869
    %871 = vrot.lane.b32.xlu0 %v862, 16
    %v872 = vpop.permute.xlu0 %871
    %v875 = vsel %vm260, %v424, %v870
    %v876 = vsel %vm260, %v470, %v872
    %v877 = vpack.c.bf16 %v876, %v875
    %v878 = vld [vmem:[%s6] sm:$0xf]
    %v879 = vld [vmem:[%s6 + $0x4] sm:$0xf]
    %v880 = vld [vmem:[%s6 + $0x8] sm:$0xf]
    %v881 = vld [vmem:[%s6 + $0xc] sm:$0xf]
    %v886 = vunpack.c.l.b16 %v878
    %v887 = vunpack.c.l.b16 %v879
    %v888 = vunpack.c.l.b16 %v880
    %v889 = vunpack.c.l.b16 %v881
    %v890 = vpack.c.b16 %v887, %v886
    %v891 = vpack.c.b16 %v889, %v888
    %v895 = vsel %vm85, %v877, 0
    %897 = vmatprep.subr.bf16.mxu0 0
    %898 = vmatpush1.bf16.msra.mxu0 %v890
    %899 = vmatprep.subr.bf16.mxu0 0
    %900 = vmatpush1.bf16.msra.mxu0 %v891
    %901 = vmatprep.subr.bf16.mxu0 0
    %902 = vmatpush1.bf16.msra.mxu0 0
    %903 = vmatprep.subr.bf16.mxu0 0
    %904 = vmatpush1.bf16.msra.mxu0 0
    %905 = vmatprep.subr.bf16.mxu0 0
    %906 = vmatpush1.bf16.msra.mxu0 0
    %907 = vmatprep.subr.bf16.mxu0 0
    %908 = vmatpush1.bf16.msra.mxu0 0
    %909 = vmatprep.subr.bf16.mxu0 0
    %910 = vmatpush1.bf16.msra.mxu0 0
    %911 = vmatprep.subr.bf16.mxu0 0
    %912 = vmatpush1.bf16.msra.mxu0 0
    %913 = vmatprep.subr.bf16.mxu0 0
    %914 = vmatpush1.bf16.msra.mxu0 0
    %915 = vmatprep.subr.bf16.mxu0 0
    %916 = vmatpush1.bf16.msra.mxu0 0
    %917 = vmatprep.subr.bf16.mxu0 0
    %918 = vmatpush1.bf16.msra.mxu0 0
    %919 = vmatprep.subr.bf16.mxu0 0
    %920 = vmatpush1.bf16.msra.mxu0 0
    %921 = vmatprep.subr.bf16.mxu0 0
    %922 = vmatpush1.bf16.msra.mxu0 0
    %923 = vmatprep.subr.bf16.mxu0 0
    %924 = vmatpush1.bf16.msra.mxu0 0
    %925 = vmatprep.subr.bf16.mxu0 0
    %926 = vmatpush1.bf16.msra.mxu0 0
    %927 = vmatprep.subr.bf16.mxu0 0
    %928 = vmatpush1.bf16.msra.mxu0 0
    %929 = vmatprep.mubr.bf16.mxu0 0
    %930 = vmatmul.mubr.bf16.gmra.mrb[0].mxu0 %v895
    %v931 = vpop.f32.mrb[0].mxu0
    %v932 = vadd.f32 %v58, %v931
    %v933 = vpop.f32.mrb[0].mxu0
    %v934 = vpop.f32.mrb[0].mxu0
    %v935 = vadd.f32 %v59, %v934
    %v936 = vpop.f32.mrb[0].mxu0
    %937 = vdwg.mxu0
    %v938 = vld [vmem:[%s11] sm:$0x1]
    %v939 = vld [vmem:[%s12] sm:$0x1]
    %v940 = vsel %vm85, %v932, 0.0
    %941 = vadd.xlane.f32.xlu0 %v940
    %v942 = vpop.xlane.xlu0 %941
    %v943 = vsel %vm85, %v935, 0.0
    %944 = vadd.xlane.f32.xlu0 %v943
    %v945 = vpop.xlane.xlu0 %944
    %v946 = vrcp.pop 32.0
    %v947 = vmul.f32 %v942, %v946
    %v948 = vmul.f32 %v945, %v946
    %v949 = vsub.f32 %v932, %v947
    %v950 = vsub.f32 %v935, %v948
    %v951 = vmul.f32 %v949, %v949
    %v952 = vmul.f32 %v950, %v950
    %v953 = vsel %vm85, %v951, 0.0
    %954 = vadd.xlane.f32.xlu0 %v953
    %v955 = vpop.xlane.xlu0 %954
    %v956 = vsel %vm85, %v952, 0.0
    %957 = vadd.xlane.f32.xlu0 %v956
    %v958 = vpop.xlane.xlu0 %957
    %v959 = vmul.f32 %v955, %v946
    %v960 = vmul.f32 %v958, %v946
    %v961 = vadd.f32 %v959, 1e-06
    %v962 = vadd.f32 %v960, 1e-06
    %v963 = vrsqrt.pop %v961
    %v964 = vrsqrt.pop %v962
    %v965 = vmul.f32 %v949, %v963
    %v966 = vmul.f32 %v950, %v964
    %v968 = vlaneseq
    %v969 = vshrl.u32 %v968, 7
    %v970 = vsub.s32 0, %v969
    %v971 = vrot.slane %v938, %v970
    %v973 = vmul.f32 %v965, %v971
    %v974 = vmul.f32 %v966, %v971
    %v976 = vlaneseq
    %v977 = vshrl.u32 %v976, 7
    %v978 = vsub.s32 0, %v977
    %v979 = vrot.slane %v939, %v978
    %v981 = vadd.f32 %v973, %v979
    %v982 = vadd.f32 %v974, %v979
    %v983 = vpack.c.bf16 %v982, %v981
    %v984 = vld [vmem:[%s7] sm:$0xf]
    %v985 = vld [vmem:[%s7 + $0x4] sm:$0xf]
    %v986 = vld [vmem:[%s7 + $0x8] sm:$0xf]
    %v987 = vld [vmem:[%s7 + $0xc] sm:$0xf]
    %v988 = vld [vmem:[%s8] sm:$0x1]
    %v990 = vlaneseq
    %v991 = vshrl.u32 %v990, 7
    %v992 = vsub.s32 0, %v991
    %v993 = vrot.slane %v988, %v992
    %v999 = vunpack.c.l.b16 %v984
    %v1000 = vunpack.c.l.b16 %v985
    %v1001 = vunpack.c.l.b16 %v986
    %v1002 = vunpack.c.l.b16 %v987
    %v1003 = vpack.c.b16 %v1000, %v999
    %v1004 = vpack.c.b16 %v1002, %v1001
    %v1008 = vsel %vm85, %v983, 0
    %1010 = vmatprep.subr.bf16.mxu0 0
    %1011 = vmatpush1.bf16.msra.mxu0 %v1003
    %1012 = vmatprep.subr.bf16.mxu0 0
    %1013 = vmatpush1.bf16.msra.mxu0 %v1004
    %1014 = vmatprep.subr.bf16.mxu0 0
    %1015 = vmatpush1.bf16.msra.mxu0 0
    %1016 = vmatprep.subr.bf16.mxu0 0
    %1017 = vmatpush1.bf16.msra.mxu0 0
    %1018 = vmatprep.subr.bf16.mxu0 0
    %1019 = vmatpush1.bf16.msra.mxu0 0
    %1020 = vmatprep.subr.bf16.mxu0 0
    %1021 = vmatpush1.bf16.msra.mxu0 0
    %1022 = vmatprep.subr.bf16.mxu0 0
    %1023 = vmatpush1.bf16.msra.mxu0 0
    %1024 = vmatprep.subr.bf16.mxu0 0
    %1025 = vmatpush1.bf16.msra.mxu0 0
    %1026 = vmatprep.subr.bf16.mxu0 0
    %1027 = vmatpush1.bf16.msra.mxu0 0
    %1028 = vmatprep.subr.bf16.mxu0 0
    %1029 = vmatpush1.bf16.msra.mxu0 0
    %1030 = vmatprep.subr.bf16.mxu0 0
    %1031 = vmatpush1.bf16.msra.mxu0 0
    %1032 = vmatprep.subr.bf16.mxu0 0
    %1033 = vmatpush1.bf16.msra.mxu0 0
    %1034 = vmatprep.subr.bf16.mxu0 0
    %1035 = vmatpush1.bf16.msra.mxu0 0
    %1036 = vmatprep.subr.bf16.mxu0 0
    %1037 = vmatpush1.bf16.msra.mxu0 0
    %1038 = vmatprep.subr.bf16.mxu0 0
    %1039 = vmatpush1.bf16.msra.mxu0 0
    %1040 = vmatprep.subr.bf16.mxu0 0
    %1041 = vmatpush1.bf16.msra.mxu0 0
    %1042 = vmatprep.mubr.bf16.mxu0 0
    %1043 = vmatmul.mubr.bf16.gmra.mrb[0].mxu0 %v1008
    %v1044 = vpop.f32.mrb[0].mxu0
    %v1045 = vadd.f32 %v993, %v1044
    %v1046 = vpop.f32.mrb[0].mxu0
    %v1047 = vpop.f32.mrb[0].mxu0
    %v1048 = vadd.f32 %v993, %v1047
    %v1049 = vpop.f32.mrb[0].mxu0
    %1050 = vdwg.mxu0
    %v1051 = vmax.f32 %v1045, 0.0
    %v1052 = vmax.f32 %v1048, 0.0
    %v1053 = vpack.c.bf16 %v1052, %v1051
    %v1054 = vld [vmem:[%s9] sm:$0xf]
    %v1055 = vld [vmem:[%s9 + $0x4] sm:$0xf]
    %v1056 = vld [vmem:[%s9 + $0x8] sm:$0xf]
    %v1057 = vld [vmem:[%s9 + $0xc] sm:$0xf]
    %v1058 = vld [vmem:[%s9 + $0x10] sm:$0xf]
    %v1059 = vld [vmem:[%s9 + $0x14] sm:$0xf]
    %v1060 = vld [vmem:[%s9 + $0x18] sm:$0xf]
    %v1061 = vld [vmem:[%s9 + $0x1c] sm:$0xf]
    %v1062 = vld [vmem:[%s10] sm:$0x1]
    %v1064 = vlaneseq
    %v1065 = vshrl.u32 %v1064, 7
    %v1066 = vsub.s32 0, %v1065
    %v1067 = vrot.slane %v1062, %v1066
    %v1077 = vunpack.c.l.b16 %v1054
    %v1078 = vunpack.c.l.b16 %v1055
    %v1079 = vunpack.c.l.b16 %v1056
    %v1080 = vunpack.c.l.b16 %v1057
    %v1081 = vunpack.c.l.b16 %v1058
    %v1082 = vunpack.c.l.b16 %v1059
    %v1083 = vunpack.c.l.b16 %v1060
    %v1084 = vunpack.c.l.b16 %v1061
    %v1085 = vpack.c.b16 %v1078, %v1077
    %v1086 = vpack.c.b16 %v1080, %v1079
    %v1087 = vpack.c.b16 %v1082, %v1081
    %v1088 = vpack.c.b16 %v1084, %v1083
    %vm1093 = vcmask 523264
    %v1095 = vsel %vm1093, %v1053, 0
    %1097 = vmatprep.subr.bf16.mxu0 0
    %1098 = vmatpush1.bf16.msra.mxu0 %v1085
    %1099 = vmatprep.subr.bf16.mxu0 0
    %1100 = vmatpush1.bf16.msra.mxu0 %v1086
    %1101 = vmatprep.subr.bf16.mxu0 0
    %1102 = vmatpush1.bf16.msra.mxu0 %v1087
    %1103 = vmatprep.subr.bf16.mxu0 0
    %1104 = vmatpush1.bf16.msra.mxu0 %v1088
    %1105 = vmatprep.subr.bf16.mxu0 0
    %1106 = vmatpush1.bf16.msra.mxu0 0
    %1107 = vmatprep.subr.bf16.mxu0 0
    %1108 = vmatpush1.bf16.msra.mxu0 0
    %1109 = vmatprep.subr.bf16.mxu0 0
    %1110 = vmatpush1.bf16.msra.mxu0 0
    %1111 = vmatprep.subr.bf16.mxu0 0
    %1112 = vmatpush1.bf16.msra.mxu0 0
    %1113 = vmatprep.subr.bf16.mxu0 0
    %1114 = vmatpush1.bf16.msra.mxu0 0
    %1115 = vmatprep.subr.bf16.mxu0 0
    %1116 = vmatpush1.bf16.msra.mxu0 0
    %1117 = vmatprep.subr.bf16.mxu0 0
    %1118 = vmatpush1.bf16.msra.mxu0 0
    %1119 = vmatprep.subr.bf16.mxu0 0
    %1120 = vmatpush1.bf16.msra.mxu0 0
    %1121 = vmatprep.subr.bf16.mxu0 0
    %1122 = vmatpush1.bf16.msra.mxu0 0
    %1123 = vmatprep.subr.bf16.mxu0 0
    %1124 = vmatpush1.bf16.msra.mxu0 0
    %1125 = vmatprep.subr.bf16.mxu0 0
    %1126 = vmatpush1.bf16.msra.mxu0 0
    %1127 = vmatprep.subr.bf16.mxu0 0
    %1128 = vmatpush1.bf16.msra.mxu0 0
    %1129 = vmatprep.mubr.bf16.mxu0 0
    %1130 = vmatmul.mubr.bf16.gmra.mrb[0].mxu0 %v1095
    %v1131 = vpop.f32.mrb[0].mxu0
    %v1132 = vadd.f32 %v1067, %v1131
    %v1133 = vpop.f32.mrb[0].mxu0
    %v1134 = vpop.f32.mrb[0].mxu0
    %v1135 = vadd.f32 %v1067, %v1134
    %v1136 = vpop.f32.mrb[0].mxu0
    %1137 = vdwg.mxu0
    %v1138 = vadd.f32 %v1132, %v981
    %v1139 = vadd.f32 %v1135, %v982
    %v1140 = vld [vmem:[%s13] sm:$0x1]
    %v1141 = vld [vmem:[%s14] sm:$0x1]
    %v1142 = vsel %vm85, %v1138, 0.0
    %1143 = vadd.xlane.f32.xlu0 %v1142
    %v1144 = vpop.xlane.xlu0 %1143
    %v1145 = vsel %vm85, %v1139, 0.0
    %1146 = vadd.xlane.f32.xlu0 %v1145
    %v1147 = vpop.xlane.xlu0 %1146
    %v1148 = vmul.f32 %v1144, %v946
    %v1149 = vmul.f32 %v1147, %v946
    %v1150 = vsub.f32 %v1138, %v1148
    %v1151 = vsub.f32 %v1139, %v1149
    %v1152 = vmul.f32 %v1150, %v1150
    %v1153 = vmul.f32 %v1151, %v1151
    %v1154 = vsel %vm85, %v1152, 0.0
    %1155 = vadd.xlane.f32.xlu0 %v1154
    %v1156 = vpop.xlane.xlu0 %1155
    %v1157 = vsel %vm85, %v1153, 0.0
    %1158 = vadd.xlane.f32.xlu0 %v1157
    %v1159 = vpop.xlane.xlu0 %1158
    %v1160 = vmul.f32 %v1156, %v946
    %v1161 = vmul.f32 %v1159, %v946
    %v1162 = vadd.f32 %v1160, 1e-06
    %v1163 = vadd.f32 %v1161, 1e-06
    %v1164 = vrsqrt.pop %v1162
    %v1165 = vrsqrt.pop %v1163
    %v1166 = vmul.f32 %v1150, %v1164
    %v1167 = vmul.f32 %v1151, %v1165
    %v1169 = vlaneseq
    %v1170 = vshrl.u32 %v1169, 7
    %v1171 = vsub.s32 0, %v1170
    %v1172 = vrot.slane %v1140, %v1171
    %v1174 = vmul.f32 %v1166, %v1172
    %v1175 = vmul.f32 %v1167, %v1172
    %v1177 = vlaneseq
    %v1178 = vshrl.u32 %v1177, 7
    %v1179 = vsub.s32 0, %v1178
    %v1180 = vrot.slane %v1141, %v1179
    %v1182 = vadd.f32 %v1174, %v1180
    %v1183 = vadd.f32 %v1175, %v1180
    %v1184 = vld [vmem:[%s15] sm:$0x1]
    %v1185 = vld [vmem:[%s16] sm:$0x1]
    %v1186 = vsel %vm85, %v1182, 0.0
    %1187 = vadd.xlane.f32.xlu0 %v1186
    %v1188 = vpop.xlane.xlu0 %1187
    %v1189 = vsel %vm85, %v1183, 0.0
    %1190 = vadd.xlane.f32.xlu0 %v1189
    %v1191 = vpop.xlane.xlu0 %1190
    %v1192 = vmul.f32 %v1188, %v946
    %v1193 = vmul.f32 %v1191, %v946
    %v1194 = vsub.f32 %v1182, %v1192
    %v1195 = vsub.f32 %v1183, %v1193
    %v1196 = vmul.f32 %v1194, %v1194
    %v1197 = vmul.f32 %v1195, %v1195
    %v1198 = vsel %vm85, %v1196, 0.0
    %1199 = vadd.xlane.f32.xlu0 %v1198
    %v1200 = vpop.xlane.xlu0 %1199
    %v1201 = vsel %vm85, %v1197, 0.0
    %1202 = vadd.xlane.f32.xlu0 %v1201
    %v1203 = vpop.xlane.xlu0 %1202
    %v1204 = vmul.f32 %v1200, %v946
    %v1205 = vmul.f32 %v1203, %v946
    %v1206 = vadd.f32 %v1204, 1e-06
    %v1207 = vadd.f32 %v1205, 1e-06
    %v1208 = vrsqrt.pop %v1206
    %v1209 = vrsqrt.pop %v1207
    %v1210 = vmul.f32 %v1194, %v1208
    %v1211 = vmul.f32 %v1195, %v1209
    %v1213 = vlaneseq
    %v1214 = vshrl.u32 %v1213, 7
    %v1215 = vsub.s32 0, %v1214
    %v1216 = vrot.slane %v1184, %v1215
    %v1218 = vmul.f32 %v1210, %v1216
    %v1219 = vmul.f32 %v1211, %v1216
    %v1221 = vlaneseq
    %v1222 = vshrl.u32 %v1221, 7
    %v1223 = vsub.s32 0, %v1222
    %v1224 = vrot.slane %v1185, %v1223
    %v1226 = vadd.f32 %v1218, %v1224
    %v1227 = vadd.f32 %v1219, %v1224
    %1228 = vst.msk [vmem:[#allocation2] sm:$0xff] %vm85, %v1226
    %1229 = vst.msk [vmem:[#allocation2 + $0x8] sm:$0xff] %vm85, %v1227
    // Predicated region
    $region70: #{tpu_custom_call.1} parent=1 // pred_check
      _
    $region71: #{tpu_custom_call.1} parent=1 // pred_check_branch
      %1231 = sbr.rel (0) target = $region73
    $region72: #{tpu_custom_call.1} parent=1 // pred_region
      %s1233 = ssub.s32 256, 256
      %1234 = vsyncadd [#allocation3], %s1233
      %s1235 = sshll.u32 [#allocation2], 4
      %s1236 = int_to_ptr.vmem [resolvable:$true] %s1235
      %1241 = dma.vmem_to_hbm [thread:$0]  %s1236, 256, %s17, [#allocation3], 128, 128, 8
    $region73: #{tpu_custom_call.1} parent=1 // pred_fallthru
      _
    // Predicated region
    $region74: #{tpu_custom_call.1} parent=1 // pred_check
      _
    $region75: #{tpu_custom_call.1} parent=1 // pred_check_branch
      %1243 = sbr.rel (0) target = $region77
    $region76: #{tpu_custom_call.1} parent=1 // pred_region
      %1244 = dma.done [#allocation3], 256
    $region77: #{tpu_custom_call.1} parent=1 // pred_fallthru
      _
    %1245 = vsyncpa [#allocation3], 1

</llo_original>
